<compile_context>
chip_gen: v7x
topology: tpu7x:2x2x1
jax: 0.10.0
libtpu: 0.0.40
codegen_flags: <defaults>
</compile_context>

<pallas_src>
import math
import functools
import numpy as np

import jax
import jax.numpy as jnp
from jax import lax
from jax.experimental import pallas as pl
from jax.experimental.pallas import tpu as pltpu

# ---- static model config (ToRGB(in_channel=4, style_dim=8, upsample=True)) ----
IN_CHANNEL = 4
STYLE_DIM = 8
OUT_CHANNEL = 3                 # RGB
KERNEL_SIZE = 1                 # ToRGB uses a 1x1 modulated conv, demodulate=False
MOD_SCALE = 1.0 / math.sqrt(STYLE_DIM)                     # EqualLinear scale (lr_mul=1)
CONV_SCALE = 1.0 / math.sqrt(IN_CHANNEL * KERNEL_SIZE**2)  # ModulatedConv2d scale

# StyleGAN2 blur kernel [1,3,3,1]: FILT = outer(k,k)/sum * 4 == outer(k/4, k/4).
_k1 = np.array([1.0, 3.0, 3.0, 1.0], dtype=np.float32)
K1N = _k1 / 4.0                           # separable 1-D factor [.25,.75,.75,.25]
FILT = np.outer(K1N, K1N)                 # (4, 4) 2-D blur filter
# F.conv2d in the reference convolves with the *flipped* filter, so the tap for
# shift k is K1N[3-k] (symmetric for [1,3,3,1]; kept explicit).
CT = [float(K1N[3 - k]) for k in range(4)]

DEFAULT_TILE_BYTES = 8 * 1024 * 1024      # x-tile budget (review: amortize grid overhead)


def _pick_row_tile(n_rows, row_bytes, max_bytes=DEFAULT_TILE_BYTES):
    """Largest multiple-of-8 divisor of n_rows whose tile stays under max_bytes
    (whole extent for small inputs)."""
    if n_rows * row_bytes <= max_bytes or n_rows <= 8:
        return n_rows
    max_rows = max(8, max_bytes // row_bytes)
    best = None
    t = 8
    while t <= min(n_rows, max_rows):
        if n_rows % t == 0:
            best = t
        t += 8
    # TODO(synk): awkward (odd/prime) n_rows fall back to the full extent; a
    # cdiv grid with pl.when masking would bound VMEM there too.
    return best if best is not None else n_rows


def _vmem_limit(nbytes):
    """Derived VMEM request: footprint + margin, clamped to sane bounds."""
    return int(min(max(int(nbytes * 1.25) + (4 << 20), 32 << 20), 127 << 20))


def _lane_merge_factor(H, W, target=512):
    """How many consecutive rows to merge into the lane axis (free reshape) so
    the last dim is lane-dense for the per-pixel (skip=None) kernel."""
    if W >= target:
        return 1
    r = max(1, min(H, target // W))
    while r > 1 and H % r:
        r -= 1
    return r


@functools.lru_cache(maxsize=None)
def _col_upsample_matrix(Ws):
    """Banded (Ws, 2Ws) matrix of the column half of upfirdn2d(up=2, pad=(2,1),
    [1,3,3,1]):  out[:, 2c]   = CT0*skip[:, c-1] + CT2*skip[:, c]
                 out[:, 2c+1] = CT1*skip[:, c]   + CT3*skip[:, c+1]
    The even/odd lane interleave and the column padding are folded in, so the
    kernel applies it with one MXU matmul per RGB channel."""
    M = np.zeros((Ws, 2 * Ws), np.float32)
    for c in range(Ws):
        M[c, 2 * c] += CT[2]
        if c >= 1:
            M[c - 1, 2 * c] += CT[0]
        M[c, 2 * c + 1] += CT[1]
        if c + 1 < Ws:
            M[c + 1, 2 * c + 1] += CT[3]
    return M


# ----------------------------------------------------------------------------
# Fused kernel: modulated 1x1 conv (demodulate=False) + bias
#               + upfirdn2d(up=2, pad=(2,1), 4x4 blur) of the raw skip
#               + residual add.
#
# Layouts:
#   x / out blocks: (1, C|3, THs, 2*OW) "row-pair merged": lane range [0, OW)
#     of merged row i is output row 2*(start+i), [OW, 2*OW) is row 2*(start+i)+1.
#   sk: raw (1, 3, Hs, Ws) skip, block index constant across row tiles.
#   m:  (Ws, 2*Ws) constant column-upsample matrix.
#   cf scratch: (3, Hs+2, OW), cf[o, 1+r] = column-filtered skip row r,
#     rows 0 / Hs+1 zero (y-boundary); filled once per batch at rt == 0.
# ----------------------------------------------------------------------------
def _make_fused_kernel(C, THs, Hs, Ws):
    OW = 2 * Ws
    NW = C + 1
    RE = (CT[0], CT[2])   # even output row 2s:  CT0*cf[s-1] + CT2*cf[s]
    RO = (CT[1], CT[3])   # odd  output row 2s+1: CT1*cf[s]  + CT3*cf[s+1]

    def kernel(wb_ref, x_ref, sk_ref, m_ref, o_ref, cf_ref):
        b = pl.program_id(0)
        rt = pl.program_id(1)

        # Once per batch: column-upsample+FIR the whole skip into the padded
        # scratch with an MXU matmul (MXU otherwise idle; no wrapper prep op).
        @pl.when(rt == 0)
        def _():
            zrow = jnp.zeros((1, OW), jnp.float32)
            mmat = m_ref[...]
            for o in range(OUT_CHANNEL):
                cf_ref[o, 0:1, :] = zrow
                cf_ref[o, Hs + 1:Hs + 2, :] = zrow
                cf_ref[o, 1:Hs + 1, :] = jnp.dot(
                    sk_ref[0, o], mmat,
                    precision=lax.Precision.HIGHEST,
                    preferred_element_type=jnp.float32)

        start = rt * THs
        if THs % 8 == 0:
            start = pl.multiple_of(start, 8)

        # ---- modulated 1x1 conv as scalar*tile VPU FMAs, x channels outermost
        #      so each x vreg is loaded once and reused for all 3 RGB outputs.
        xb = x_ref[0]                                        # (C, THs, 2*OW)
        accs = [None] * OUT_CHANNEL
        for c in range(C):
            xc = xb[c]
            for o in range(OUT_CHANNEL):
                woff = (b * OUT_CHANNEL + o) * NW
                t = xc * wb_ref[woff + c]
                accs[o] = t if accs[o] is None else accs[o] + t

        # ---- per RGB channel: bias + 2-tap row polyphase of the column-filtered
        #      skip (computed right before use -> small live intermediates).
        for o in range(OUT_CHANNEL):
            woff = (b * OUT_CHANNEL + o) * NW
            a = accs[o] + wb_ref[woff + C]                   # rgb bias
            slab = cf_ref[o, pl.ds(start, THs + 2), :]       # (THs+2, OW)
            even = slab[0:THs, :] * RE[0] + slab[1:THs + 1, :] * RE[1]
            odd = slab[1:THs + 1, :] * RO[0] + slab[2:THs + 2, :] * RO[1]
            # merged-row layout: first OW lanes = even output row, last OW = odd
            o_ref[0, o, :, 0:OW] = a[:, 0:OW] + even
            o_ref[0, o, :, OW:2 * OW] = a[:, OW:2 * OW] + odd

    return kernel


# Plain modulated-conv kernel for the skip=None path (per-pixel op on a
# lane-dense row-merged view of x).
def _make_rgb_kernel(C):
    NW = C + 1

    def kernel(wb_ref, x_ref, o_ref):
        b = pl.program_id(0)
        xb = x_ref[0]                                        # (C, TR, L)
        accs = [None] * OUT_CHANNEL
        for c in range(C):
            xc = xb[c]
            for o in range(OUT_CHANNEL):
                woff = (b * OUT_CHANNEL + o) * NW
                t = xc * wb_ref[woff + c]
                accs[o] = t if accs[o] is None else accs[o] + t
        for o in range(OUT_CHANNEL):
            woff = (b * OUT_CHANNEL + o) * NW
            o_ref[0, o] = accs[o] + wb_ref[woff + C]

    return kernel


# ----------------------------------------------------------------------------
# ToRGB forward
# ----------------------------------------------------------------------------
@functools.partial(jax.jit, static_argnames=("tile_bytes",))
def to_rgb_forward(x, style, skip, params, *, tile_bytes=DEFAULT_TILE_BYTES):
    B, C, H, W = x.shape
    # Per-batch effective 1x1-conv weights + bias (B*3*(C+1) floats) computed
    # once in XLA and read from SMEM inside the kernel.
    s = jnp.matmul(style, params["mod_w"].T * MOD_SCALE,
                   precision=lax.Precision.HIGHEST) + params["mod_b"][None, :]   # (B, C)
    conv_w = params["conv_w"].reshape(OUT_CHANNEL, C)
    w_eff = CONV_SCALE * conv_w[None, :, :] * s[:, None, :]                      # (B, 3, C)
    bias = jnp.broadcast_to(params["rgb_bias"].reshape(1, OUT_CHANNEL, 1),
                            (B, OUT_CHANNEL, 1))
    wb_flat = jnp.concatenate([w_eff, bias], axis=-1).astype(jnp.float32).reshape(-1)

    if skip is None:
        # Lane-dense view: merge r consecutive rows into the lane axis (free).
        r = _lane_merge_factor(H, W)
        L = r * W
        R = H // r
        x_v = x.reshape(B, C, R, L)
        TR = _pick_row_tile(R, C * L * 4, tile_bytes)
        vmem = _vmem_limit(2 * (C + OUT_CHANNEL) * TR * L * 4)
        out = pl.pallas_call(
            _make_rgb_kernel(C),
            out_shape=jax.ShapeDtypeStruct((B, OUT_CHANNEL, R, L), jnp.float32),
            grid_spec=pltpu.PrefetchScalarGridSpec(
                num_scalar_prefetch=0,
                grid=(B, R // TR),
                in_specs=[
                    pl.BlockSpec(memory_space=pltpu.MemorySpace.SMEM),
                    pl.BlockSpec((1, C, TR, L), lambda b, rt: (b, 0, rt, 0)),
                ],
                out_specs=pl.BlockSpec((1, OUT_CHANNEL, TR, L),
                                       lambda b, rt: (b, 0, rt, 0)),
            ),
            compiler_params=pltpu.CompilerParams(
                dimension_semantics=("parallel", "parallel"),
                vmem_limit_bytes=vmem),
        )(wb_flat, x_v)
        return out.reshape(B, OUT_CHANNEL, H, W)

    Bs, Cs, Hs, Ws = skip.shape
    assert Bs == B and Cs == OUT_CHANNEL and H == 2 * Hs and W == 2 * Ws
    OW = W                                           # output width (= 2*Ws)

    # Row-pair merged view of x / out (free, layout-preserving reshape).
    x_m = x.reshape(B, C, Hs, 2 * OW)
    THs = _pick_row_tile(Hs, C * 2 * OW * 4, tile_bytes)
    Mcol = jnp.asarray(_col_upsample_matrix(Ws))     # (Ws, 2Ws) constant

    # Derived VMEM request (x/out double-buffered tiles + per-batch residents).
    tiles_b = 2 * (C + OUT_CHANNEL) * THs * 2 * OW * 4
    resident_b = (2 * OUT_CHANNEL * Hs * Ws * 4      # raw skip block (double-buffered)
                  + 2 * Ws * 2 * Ws * 4              # column-upsample matrix
                  + OUT_CHANNEL * (Hs + 2) * OW * 4)  # cf scratch
    vmem = _vmem_limit(tiles_b + resident_b)
    # TODO(synk): for >=2K resolutions on v7x (64 MiB VMEM/TC), row-tile the skip
    # with a manual make_async_copy halo (skip in pl.ANY) instead of keeping the
    # whole skip block + cf scratch resident per batch.

    out = pl.pallas_call(
        _make_fused_kernel(C, THs, Hs, Ws),
        out_shape=jax.ShapeDtypeStruct((B, OUT_CHANNEL, Hs, 2 * OW), jnp.float32),
        grid_spec=pltpu.PrefetchScalarGridSpec(
            num_scalar_prefetch=0,
            grid=(B, Hs // THs),
            in_specs=[
                pl.BlockSpec(memory_space=pltpu.MemorySpace.SMEM),
                pl.BlockSpec((1, C, THs, 2 * OW), lambda b, rt: (b, 0, rt, 0)),
                # raw skip, block index constant across row tiles -> one fetch/batch
                pl.BlockSpec((1, OUT_CHANNEL, Hs, Ws), lambda b, rt: (b, 0, 0, 0)),
                pl.BlockSpec((Ws, 2 * Ws), lambda b, rt: (0, 0)),
            ],
            out_specs=pl.BlockSpec((1, OUT_CHANNEL, THs, 2 * OW),
                                   lambda b, rt: (b, 0, rt, 0)),
            scratch_shapes=[pltpu.VMEM((OUT_CHANNEL, Hs + 2, OW), jnp.float32)],
        ),
        compiler_params=pltpu.CompilerParams(
            # batch axis parallel (megacore splits on whole batches); the row-tile
            # axis is sequential because the cf scratch written at rt == 0 is
            # reused by the later row tiles of the same batch.
            dimension_semantics=("parallel", "arbitrary"),
            vmem_limit_bytes=vmem),
    )(wb_flat, x_m, skip, Mcol)
    return out.reshape(B, OUT_CHANNEL, H, W)


# Pure-JAX reference (independent of the separable/polyphase/matmul decomposition).
def to_rgb_reference(x, style, skip, params):
    s = jnp.matmul(style, (params["mod_w"] * MOD_SCALE).T,
                   precision=lax.Precision.HIGHEST) + params["mod_b"]
    w = CONV_SCALE * params["conv_w"].reshape(1, OUT_CHANNEL, IN_CHANNEL) * s[:, None, :]
    out = jnp.einsum("boc,bchw->bohw", w, x, precision=lax.Precision.HIGHEST) \
        + params["rgb_bias"].reshape(1, OUT_CHANNEL, 1, 1)
    if skip is not None:
        filt = jnp.asarray(np.flip(FILT, (0, 1)).copy())
        w4 = jnp.tile(filt[None, None], (OUT_CHANNEL, 1, 1, 1))        # (3,1,4,4)
        skip_up = lax.conv_general_dilated(
            skip, w4, window_strides=(1, 1), padding=((2, 2), (2, 2)),
            lhs_dilation=(2, 2),
            dimension_numbers=("NCHW", "OIHW", "NCHW"),
            feature_group_count=OUT_CHANNEL,
            precision=lax.Precision.HIGHEST)
        out = out + skip_up
    return out


if __name__ == "__main__":
    key = jax.random.PRNGKey(0)
    kx, ks, kskip, kw, kmw, kx2, ks2, kskip2 = jax.random.split(key, 8)

    # deterministic parameter init matching the module's __init__ shapes
    params = {
        "conv_w": jax.random.normal(kw, (1, OUT_CHANNEL, IN_CHANNEL, 1, 1), jnp.float32),
        "mod_w": jax.random.normal(kmw, (IN_CHANNEL, STYLE_DIM), jnp.float32),  # / lr_mul (=1)
        "mod_b": jnp.ones((IN_CHANNEL,), jnp.float32),                          # bias_init=1
        "rgb_bias": jnp.zeros((1, OUT_CHANNEL, 1, 1), jnp.float32),
    }

    # ---- test 1: small shape, fused path (with skip) ----
    B, H, W = 2, 16, 16
    x = jax.random.normal(kx, (B, IN_CHANNEL, H, W), jnp.float32)
    style = jax.random.normal(ks, (B, STYLE_DIM), jnp.float32)
    skip = jax.random.normal(kskip, (B, OUT_CHANNEL, H // 2, W // 2), jnp.float32)

    out = jax.block_until_ready(to_rgb_forward(x, style, skip, params))
    ref = to_rgb_reference(x, style, skip, params)
    np.testing.assert_allclose(np.asarray(out), np.asarray(ref), atol=1e-5, rtol=1e-5)

    # ---- test 2: skip=None path ----
    out2 = jax.block_until_ready(to_rgb_forward(x, style, None, params))
    ref2 = to_rgb_reference(x, style, None, params)
    np.testing.assert_allclose(np.asarray(out2), np.asarray(ref2), atol=1e-5, rtol=1e-5)

    # ---- test 3: larger shape with a forced small tile budget so the row-tiled
    #      path (multiple row tiles, dynamic halo slab from the per-batch cf
    #      scratch, boundary tiles) is actually exercised. ----
    H2 = W2 = 64
    x2 = jax.random.normal(kx2, (B, IN_CHANNEL, H2, W2), jnp.float32)
    style2 = jax.random.normal(ks2, (B, STYLE_DIM), jnp.float32)
    skip2 = jax.random.normal(kskip2, (B, OUT_CHANNEL, H2 // 2, W2 // 2), jnp.float32)
    out3 = jax.block_until_ready(
        to_rgb_forward(x2, style2, skip2, params, tile_bytes=16 * 1024))  # -> 4 row tiles
    ref3 = to_rgb_reference(x2, style2, skip2, params)
    np.testing.assert_allclose(np.asarray(out3), np.asarray(ref3), atol=1e-5, rtol=1e-5)

    print("KERNEL_OK")
</pallas_src>

<mosaic_0001>
module attributes {stable_mosaic.version = 11 : i64} {
  func.func @kernel(%arg0: i32, %arg1: i32, %arg2: memref<30xf32, #tpu.memory_space<smem>>, %arg3: memref<1x4x8x32xf32, #tpu.memory_space<vmem>>, %arg4: memref<1x3x8x8xf32, #tpu.memory_space<vmem>>, %arg5: memref<8x16xf32, #tpu.memory_space<vmem>>, %arg6: memref<1x3x8x32xf32, #tpu.memory_space<vmem>>, %arg7: memref<3x10x16xf32, #tpu.memory_space<vmem>>) attributes {dimension_semantics = [#tpu.dimension_semantics<parallel>, #tpu.dimension_semantics<arbitrary>], iteration_bounds = array<i64: 2, 1>, scalar_prefetch = 0 : i64, scratch_operands = 1 : i64, tpu.core_type = #tpu.core_type<tc>, window_params = [{transform_indices = @transform_0, window_bounds = array<i64: 30>}, {transform_indices = @transform_1, window_bounds = array<i64: 1, 4, 8, 32>}, {transform_indices = @transform_2, window_bounds = array<i64: 1, 3, 8, 8>}, {pipeline_mode = #tpu.pipeline_mode<synchronous>, transform_indices = @transform_3, window_bounds = array<i64: 8, 16>}, {transform_indices = @transform_4, window_bounds = array<i64: 1, 3, 8, 32>}]} {
    %c0_i32 = arith.constant 0 : i32
    %0 = arith.cmpi eq, %arg1, %c0_i32 : i32
    %1 = arith.extui %0 : i1 to i32
    %c0_i32_0 = arith.constant 0 : i32
    %2 = arith.cmpi ne, %1, %c0_i32_0 : i32
    scf.if %2 {
      %cst_97 = arith.constant 0.000000e+00 : f32
      %225 = vector.broadcast %cst_97 : f32 to vector<1x16xf32>
      %c0_98 = arith.constant 0 : index
      %c0_99 = arith.constant 0 : index
      %226 = vector.load %arg5[%c0_98, %c0_99] : memref<8x16xf32, #tpu.memory_space<vmem>>, vector<8x16xf32>
      %c0_100 = arith.constant 0 : index
      %c0_101 = arith.constant 0 : index
      %c0_102 = arith.constant 0 : index
      %227 = vector.load %arg7[%c0_100, %c0_101, %c0_102] : memref<3x10x16xf32, #tpu.memory_space<vmem>>, vector<1x1x16xf32>
      %228 = vector.shape_cast %227 : vector<1x1x16xf32> to vector<1x16xf32>
      %229 = vector.shape_cast %225 : vector<1x16xf32> to vector<1x1x16xf32>
      tpu.vector_store %arg7[%c0_100, %c0_101, %c0_102], %229 {strides = array<i32>} : memref<3x10x16xf32, #tpu.memory_space<vmem>>, vector<1x1x16xf32>,
      %c0_103 = arith.constant 0 : index
      %c9 = arith.constant 9 : index
      %c0_104 = arith.constant 0 : index
      %230 = vector.load %arg7[%c0_103, %c9, %c0_104] : memref<3x10x16xf32, #tpu.memory_space<vmem>>, vector<1x1x16xf32>
      %231 = vector.shape_cast %230 : vector<1x1x16xf32> to vector<1x16xf32>
      %232 = vector.shape_cast %225 : vector<1x16xf32> to vector<1x1x16xf32>
      tpu.vector_store %arg7[%c0_103, %c9, %c0_104], %232 {strides = array<i32>} : memref<3x10x16xf32, #tpu.memory_space<vmem>>, vector<1x1x16xf32>,
      %c0_105 = arith.constant 0 : index
      %c0_106 = arith.constant 0 : index
      %c0_107 = arith.constant 0 : index
      %c0_108 = arith.constant 0 : index
      %233 = vector.load %arg4[%c0_105, %c0_106, %c0_107, %c0_108] : memref<1x3x8x8xf32, #tpu.memory_space<vmem>>, vector<1x1x8x8xf32>
      %234 = vector.shape_cast %233 : vector<1x1x8x8xf32> to vector<8x8xf32>
      %cst_109 = arith.constant dense<0.000000e+00> : vector<8x16xf32>
      %235 = tpu.matmul %234, %226, %cst_109 {dimension_numbers = #tpu.dot_dimension_numbers<[1], [0], [0], [1], [0, 0, 1, 1], [], []>, precision = #tpu.contract_precision<fp32>} : vector<8x8xf32>, vector<8x16xf32>, vector<8x16xf32> -> vector<8x16xf32>
      %c0_110 = arith.constant 0 : index
      %c1_111 = arith.constant 1 : index
      %c0_112 = arith.constant 0 : index
      %236 = vector.load %arg7[%c0_110, %c1_111, %c0_112] : memref<3x10x16xf32, #tpu.memory_space<vmem>>, vector<1x8x16xf32>
      %237 = vector.shape_cast %236 : vector<1x8x16xf32> to vector<8x16xf32>
      %238 = vector.shape_cast %235 : vector<8x16xf32> to vector<1x8x16xf32>
      tpu.vector_store %arg7[%c0_110, %c1_111, %c0_112], %238 {strides = array<i32>} : memref<3x10x16xf32, #tpu.memory_space<vmem>>, vector<1x8x16xf32>,
      %c1_113 = arith.constant 1 : index
      %c0_114 = arith.constant 0 : index
      %c0_115 = arith.constant 0 : index
      %239 = vector.load %arg7[%c1_113, %c0_114, %c0_115] : memref<3x10x16xf32, #tpu.memory_space<vmem>>, vector<1x1x16xf32>
      %240 = vector.shape_cast %239 : vector<1x1x16xf32> to vector<1x16xf32>
      %241 = vector.shape_cast %225 : vector<1x16xf32> to vector<1x1x16xf32>
      tpu.vector_store %arg7[%c1_113, %c0_114, %c0_115], %241 {strides = array<i32>} : memref<3x10x16xf32, #tpu.memory_space<vmem>>, vector<1x1x16xf32>,
      %c1_116 = arith.constant 1 : index
      %c9_117 = arith.constant 9 : index
      %c0_118 = arith.constant 0 : index
      %242 = vector.load %arg7[%c1_116, %c9_117, %c0_118] : memref<3x10x16xf32, #tpu.memory_space<vmem>>, vector<1x1x16xf32>
      %243 = vector.shape_cast %242 : vector<1x1x16xf32> to vector<1x16xf32>
      %244 = vector.shape_cast %225 : vector<1x16xf32> to vector<1x1x16xf32>
      tpu.vector_store %arg7[%c1_116, %c9_117, %c0_118], %244 {strides = array<i32>} : memref<3x10x16xf32, #tpu.memory_space<vmem>>, vector<1x1x16xf32>,
      %c0_119 = arith.constant 0 : index
      %c1_120 = arith.constant 1 : index
      %c0_121 = arith.constant 0 : index
      %c0_122 = arith.constant 0 : index
      %245 = vector.load %arg4[%c0_119, %c1_120, %c0_121, %c0_122] : memref<1x3x8x8xf32, #tpu.memory_space<vmem>>, vector<1x1x8x8xf32>
      %246 = vector.shape_cast %245 : vector<1x1x8x8xf32> to vector<8x8xf32>
      %cst_123 = arith.constant dense<0.000000e+00> : vector<8x16xf32>
      %247 = tpu.matmul %246, %226, %cst_123 {dimension_numbers = #tpu.dot_dimension_numbers<[1], [0], [0], [1], [0, 0, 1, 1], [], []>, precision = #tpu.contract_precision<fp32>} : vector<8x8xf32>, vector<8x16xf32>, vector<8x16xf32> -> vector<8x16xf32>
      %c1_124 = arith.constant 1 : index
      %c1_125 = arith.constant 1 : index
      %c0_126 = arith.constant 0 : index
      %248 = vector.load %arg7[%c1_124, %c1_125, %c0_126] : memref<3x10x16xf32, #tpu.memory_space<vmem>>, vector<1x8x16xf32>
      %249 = vector.shape_cast %248 : vector<1x8x16xf32> to vector<8x16xf32>
      %250 = vector.shape_cast %247 : vector<8x16xf32> to vector<1x8x16xf32>
      tpu.vector_store %arg7[%c1_124, %c1_125, %c0_126], %250 {strides = array<i32>} : memref<3x10x16xf32, #tpu.memory_space<vmem>>, vector<1x8x16xf32>,
      %c2_127 = arith.constant 2 : index
      %c0_128 = arith.constant 0 : index
      %c0_129 = arith.constant 0 : index
      %251 = vector.load %arg7[%c2_127, %c0_128, %c0_129] : memref<3x10x16xf32, #tpu.memory_space<vmem>>, vector<1x1x16xf32>
      %252 = vector.shape_cast %251 : vector<1x1x16xf32> to vector<1x16xf32>
      %253 = vector.shape_cast %225 : vector<1x16xf32> to vector<1x1x16xf32>
      tpu.vector_store %arg7[%c2_127, %c0_128, %c0_129], %253 {strides = array<i32>} : memref<3x10x16xf32, #tpu.memory_space<vmem>>, vector<1x1x16xf32>,
      %c2_130 = arith.constant 2 : index
      %c9_131 = arith.constant 9 : index
      %c0_132 = arith.constant 0 : index
      %254 = vector.load %arg7[%c2_130, %c9_131, %c0_132] : memref<3x10x16xf32, #tpu.memory_space<vmem>>, vector<1x1x16xf32>
      %255 = vector.shape_cast %254 : vector<1x1x16xf32> to vector<1x16xf32>
      %256 = vector.shape_cast %225 : vector<1x16xf32> to vector<1x1x16xf32>
      tpu.vector_store %arg7[%c2_130, %c9_131, %c0_132], %256 {strides = array<i32>} : memref<3x10x16xf32, #tpu.memory_space<vmem>>, vector<1x1x16xf32>,
      %c0_133 = arith.constant 0 : index
      %c2_134 = arith.constant 2 : index
      %c0_135 = arith.constant 0 : index
      %c0_136 = arith.constant 0 : index
      %257 = vector.load %arg4[%c0_133, %c2_134, %c0_135, %c0_136] : memref<1x3x8x8xf32, #tpu.memory_space<vmem>>, vector<1x1x8x8xf32>
      %258 = vector.shape_cast %257 : vector<1x1x8x8xf32> to vector<8x8xf32>
      %cst_137 = arith.constant dense<0.000000e+00> : vector<8x16xf32>
      %259 = tpu.matmul %258, %226, %cst_137 {dimension_numbers = #tpu.dot_dimension_numbers<[1], [0], [0], [1], [0, 0, 1, 1], [], []>, precision = #tpu.contract_precision<fp32>} : vector<8x8xf32>, vector<8x16xf32>, vector<8x16xf32> -> vector<8x16xf32>
      %c2_138 = arith.constant 2 : index
      %c1_139 = arith.constant 1 : index
      %c0_140 = arith.constant 0 : index
      %260 = vector.load %arg7[%c2_138, %c1_139, %c0_140] : memref<3x10x16xf32, #tpu.memory_space<vmem>>, vector<1x8x16xf32>
      %261 = vector.shape_cast %260 : vector<1x8x16xf32> to vector<8x16xf32>
      %262 = vector.shape_cast %259 : vector<8x16xf32> to vector<1x8x16xf32>
      tpu.vector_store %arg7[%c2_138, %c1_139, %c0_140], %262 {strides = array<i32>} : memref<3x10x16xf32, #tpu.memory_space<vmem>>, vector<1x8x16xf32>,
    } else {
    }
    %c8_i32 = arith.constant 8 : i32
    %3 = arith.muli %arg1, %c8_i32 : i32
    %4 = tpu.assume_multiple %3, 8 : i32
    %c0 = arith.constant 0 : index
    %c0_1 = arith.constant 0 : index
    %c0_2 = arith.constant 0 : index
    %c0_3 = arith.constant 0 : index
    %5 = vector.load %arg3[%c0, %c0_1, %c0_2, %c0_3] : memref<1x4x8x32xf32, #tpu.memory_space<vmem>>, vector<1x4x8x32xf32>
    %6 = vector.shape_cast %5 : vector<1x4x8x32xf32> to vector<4x8x32xf32>
    %7 = vector.extract_strided_slice %6 {offsets = [0, 0, 0], sizes = [1, 8, 32], strides = [1, 1, 1]} : vector<4x8x32xf32> to vector<1x8x32xf32>
    %8 = vector.shape_cast %7 : vector<1x8x32xf32> to vector<8x32xf32>
    %c3_i32 = arith.constant 3 : i32
    %9 = arith.muli %arg0, %c3_i32 : i32
    %c0_i32_4 = arith.constant 0 : i32
    %10 = arith.addi %9, %c0_i32_4 : i32
    %c5_i32 = arith.constant 5 : i32
    %11 = arith.muli %10, %c5_i32 : i32
    %c0_i32_5 = arith.constant 0 : i32
    %12 = arith.addi %11, %c0_i32_5 : i32
    %13 = arith.index_cast %12 : i32 to index
    %14 = memref.load %arg2[%13] : memref<30xf32, #tpu.memory_space<smem>>
    %15 = vector.broadcast %14 : f32 to vector<8x32xf32>
    %16 = arith.mulf %8, %15 : vector<8x32xf32>
    %c3_i32_6 = arith.constant 3 : i32
    %17 = arith.muli %arg0, %c3_i32_6 : i32
    %c1_i32 = arith.constant 1 : i32
    %18 = arith.addi %17, %c1_i32 : i32
    %c5_i32_7 = arith.constant 5 : i32
    %19 = arith.muli %18, %c5_i32_7 : i32
    %c0_i32_8 = arith.constant 0 : i32
    %20 = arith.addi %19, %c0_i32_8 : i32
    %21 = arith.index_cast %20 : i32 to index
    %22 = memref.load %arg2[%21] : memref<30xf32, #tpu.memory_space<smem>>
    %23 = vector.broadcast %22 : f32 to vector<8x32xf32>
    %24 = arith.mulf %8, %23 : vector<8x32xf32>
    %c3_i32_9 = arith.constant 3 : i32
    %25 = arith.muli %arg0, %c3_i32_9 : i32
    %c2_i32 = arith.constant 2 : i32
    %26 = arith.addi %25, %c2_i32 : i32
    %c5_i32_10 = arith.constant 5 : i32
    %27 = arith.muli %26, %c5_i32_10 : i32
    %c0_i32_11 = arith.constant 0 : i32
    %28 = arith.addi %27, %c0_i32_11 : i32
    %29 = arith.index_cast %28 : i32 to index
    %30 = memref.load %arg2[%29] : memref<30xf32, #tpu.memory_space<smem>>
    %31 = vector.broadcast %30 : f32 to vector<8x32xf32>
    %32 = arith.mulf %8, %31 : vector<8x32xf32>
    %33 = vector.extract_strided_slice %6 {offsets = [1, 0, 0], sizes = [1, 8, 32], strides = [1, 1, 1]} : vector<4x8x32xf32> to vector<1x8x32xf32>
    %34 = vector.shape_cast %33 : vector<1x8x32xf32> to vector<8x32xf32>
    %c3_i32_12 = arith.constant 3 : i32
    %35 = arith.muli %arg0, %c3_i32_12 : i32
    %c0_i32_13 = arith.constant 0 : i32
    %36 = arith.addi %35, %c0_i32_13 : i32
    %c5_i32_14 = arith.constant 5 : i32
    %37 = arith.muli %36, %c5_i32_14 : i32
    %c1_i32_15 = arith.constant 1 : i32
    %38 = arith.addi %37, %c1_i32_15 : i32
    %39 = arith.index_cast %38 : i32 to index
    %40 = memref.load %arg2[%39] : memref<30xf32, #tpu.memory_space<smem>>
    %41 = vector.broadcast %40 : f32 to vector<8x32xf32>
    %42 = arith.mulf %34, %41 : vector<8x32xf32>
    %43 = arith.addf %16, %42 : vector<8x32xf32>
    %c3_i32_16 = arith.constant 3 : i32
    %44 = arith.muli %arg0, %c3_i32_16 : i32
    %c1_i32_17 = arith.constant 1 : i32
    %45 = arith.addi %44, %c1_i32_17 : i32
    %c5_i32_18 = arith.constant 5 : i32
    %46 = arith.muli %45, %c5_i32_18 : i32
    %c1_i32_19 = arith.constant 1 : i32
    %47 = arith.addi %46, %c1_i32_19 : i32
    %48 = arith.index_cast %47 : i32 to index
    %49 = memref.load %arg2[%48] : memref<30xf32, #tpu.memory_space<smem>>
    %50 = vector.broadcast %49 : f32 to vector<8x32xf32>
    %51 = arith.mulf %34, %50 : vector<8x32xf32>
    %52 = arith.addf %24, %51 : vector<8x32xf32>
    %c3_i32_20 = arith.constant 3 : i32
    %53 = arith.muli %arg0, %c3_i32_20 : i32
    %c2_i32_21 = arith.constant 2 : i32
    %54 = arith.addi %53, %c2_i32_21 : i32
    %c5_i32_22 = arith.constant 5 : i32
    %55 = arith.muli %54, %c5_i32_22 : i32
    %c1_i32_23 = arith.constant 1 : i32
    %56 = arith.addi %55, %c1_i32_23 : i32
    %57 = arith.index_cast %56 : i32 to index
    %58 = memref.load %arg2[%57] : memref<30xf32, #tpu.memory_space<smem>>
    %59 = vector.broadcast %58 : f32 to vector<8x32xf32>
    %60 = arith.mulf %34, %59 : vector<8x32xf32>
    %61 = arith.addf %32, %60 : vector<8x32xf32>
    %62 = vector.extract_strided_slice %6 {offsets = [2, 0, 0], sizes = [1, 8, 32], strides = [1, 1, 1]} : vector<4x8x32xf32> to vector<1x8x32xf32>
    %63 = vector.shape_cast %62 : vector<1x8x32xf32> to vector<8x32xf32>
    %c3_i32_24 = arith.constant 3 : i32
    %64 = arith.muli %arg0, %c3_i32_24 : i32
    %c0_i32_25 = arith.constant 0 : i32
    %65 = arith.addi %64, %c0_i32_25 : i32
    %c5_i32_26 = arith.constant 5 : i32
    %66 = arith.muli %65, %c5_i32_26 : i32
    %c2_i32_27 = arith.constant 2 : i32
    %67 = arith.addi %66, %c2_i32_27 : i32
    %68 = arith.index_cast %67 : i32 to index
    %69 = memref.load %arg2[%68] : memref<30xf32, #tpu.memory_space<smem>>
    %70 = vector.broadcast %69 : f32 to vector<8x32xf32>
    %71 = arith.mulf %63, %70 : vector<8x32xf32>
    %72 = arith.addf %43, %71 : vector<8x32xf32>
    %c3_i32_28 = arith.constant 3 : i32
    %73 = arith.muli %arg0, %c3_i32_28 : i32
    %c1_i32_29 = arith.constant 1 : i32
    %74 = arith.addi %73, %c1_i32_29 : i32
    %c5_i32_30 = arith.constant 5 : i32
    %75 = arith.muli %74, %c5_i32_30 : i32
    %c2_i32_31 = arith.constant 2 : i32
    %76 = arith.addi %75, %c2_i32_31 : i32
    %77 = arith.index_cast %76 : i32 to index
    %78 = memref.load %arg2[%77] : memref<30xf32, #tpu.memory_space<smem>>
    %79 = vector.broadcast %78 : f32 to vector<8x32xf32>
    %80 = arith.mulf %63, %79 : vector<8x32xf32>
    %81 = arith.addf %52, %80 : vector<8x32xf32>
    %c3_i32_32 = arith.constant 3 : i32
    %82 = arith.muli %arg0, %c3_i32_32 : i32
    %c2_i32_33 = arith.constant 2 : i32
    %83 = arith.addi %82, %c2_i32_33 : i32
    %c5_i32_34 = arith.constant 5 : i32
    %84 = arith.muli %83, %c5_i32_34 : i32
    %c2_i32_35 = arith.constant 2 : i32
    %85 = arith.addi %84, %c2_i32_35 : i32
    %86 = arith.index_cast %85 : i32 to index
    %87 = memref.load %arg2[%86] : memref<30xf32, #tpu.memory_space<smem>>
    %88 = vector.broadcast %87 : f32 to vector<8x32xf32>
    %89 = arith.mulf %63, %88 : vector<8x32xf32>
    %90 = arith.addf %61, %89 : vector<8x32xf32>
    %91 = vector.extract_strided_slice %6 {offsets = [3, 0, 0], sizes = [1, 8, 32], strides = [1, 1, 1]} : vector<4x8x32xf32> to vector<1x8x32xf32>
    %92 = vector.shape_cast %91 : vector<1x8x32xf32> to vector<8x32xf32>
    %c3_i32_36 = arith.constant 3 : i32
    %93 = arith.muli %arg0, %c3_i32_36 : i32
    %c0_i32_37 = arith.constant 0 : i32
    %94 = arith.addi %93, %c0_i32_37 : i32
    %c5_i32_38 = arith.constant 5 : i32
    %95 = arith.muli %94, %c5_i32_38 : i32
    %c3_i32_39 = arith.constant 3 : i32
    %96 = arith.addi %95, %c3_i32_39 : i32
    %97 = arith.index_cast %96 : i32 to index
    %98 = memref.load %arg2[%97] : memref<30xf32, #tpu.memory_space<smem>>
    %99 = vector.broadcast %98 : f32 to vector<8x32xf32>
    %100 = arith.mulf %92, %99 : vector<8x32xf32>
    %101 = arith.addf %72, %100 : vector<8x32xf32>
    %c3_i32_40 = arith.constant 3 : i32
    %102 = arith.muli %arg0, %c3_i32_40 : i32
    %c1_i32_41 = arith.constant 1 : i32
    %103 = arith.addi %102, %c1_i32_41 : i32
    %c5_i32_42 = arith.constant 5 : i32
    %104 = arith.muli %103, %c5_i32_42 : i32
    %c3_i32_43 = arith.constant 3 : i32
    %105 = arith.addi %104, %c3_i32_43 : i32
    %106 = arith.index_cast %105 : i32 to index
    %107 = memref.load %arg2[%106] : memref<30xf32, #tpu.memory_space<smem>>
    %108 = vector.broadcast %107 : f32 to vector<8x32xf32>
    %109 = arith.mulf %92, %108 : vector<8x32xf32>
    %110 = arith.addf %81, %109 : vector<8x32xf32>
    %c3_i32_44 = arith.constant 3 : i32
    %111 = arith.muli %arg0, %c3_i32_44 : i32
    %c2_i32_45 = arith.constant 2 : i32
    %112 = arith.addi %111, %c2_i32_45 : i32
    %c5_i32_46 = arith.constant 5 : i32
    %113 = arith.muli %112, %c5_i32_46 : i32
    %c3_i32_47 = arith.constant 3 : i32
    %114 = arith.addi %113, %c3_i32_47 : i32
    %115 = arith.index_cast %114 : i32 to index
    %116 = memref.load %arg2[%115] : memref<30xf32, #tpu.memory_space<smem>>
    %117 = vector.broadcast %116 : f32 to vector<8x32xf32>
    %118 = arith.mulf %92, %117 : vector<8x32xf32>
    %119 = arith.addf %90, %118 : vector<8x32xf32>
    %c3_i32_48 = arith.constant 3 : i32
    %120 = arith.muli %arg0, %c3_i32_48 : i32
    %c0_i32_49 = arith.constant 0 : i32
    %121 = arith.addi %120, %c0_i32_49 : i32
    %c5_i32_50 = arith.constant 5 : i32
    %122 = arith.muli %121, %c5_i32_50 : i32
    %c4_i32 = arith.constant 4 : i32
    %123 = arith.addi %122, %c4_i32 : i32
    %124 = arith.index_cast %123 : i32 to index
    %125 = memref.load %arg2[%124] : memref<30xf32, #tpu.memory_space<smem>>
    %126 = vector.broadcast %125 : f32 to vector<8x32xf32>
    %127 = arith.addf %101, %126 : vector<8x32xf32>
    %c0_51 = arith.constant 0 : index
    %128 = arith.index_cast %4 : i32 to index
    %c0_52 = arith.constant 0 : index
    %129 = vector.load %arg7[%c0_51, %128, %c0_52] : memref<3x10x16xf32, #tpu.memory_space<vmem>>, vector<1x10x16xf32>
    %130 = vector.shape_cast %129 : vector<1x10x16xf32> to vector<10x16xf32>
    %131 = vector.extract_strided_slice %130 {offsets = [0, 0], sizes = [8, 16], strides = [1, 1]} : vector<10x16xf32> to vector<8x16xf32>
    %cst = arith.constant 2.500000e-01 : f32
    %132 = vector.broadcast %cst : f32 to vector<8x16xf32>
    %133 = arith.mulf %131, %132 : vector<8x16xf32>
    %134 = vector.extract_strided_slice %130 {offsets = [1, 0], sizes = [8, 16], strides = [1, 1]} : vector<10x16xf32> to vector<8x16xf32>
    %cst_53 = arith.constant 7.500000e-01 : f32
    %135 = vector.broadcast %cst_53 : f32 to vector<8x16xf32>
    %136 = arith.mulf %134, %135 : vector<8x16xf32>
    %137 = arith.addf %133, %136 : vector<8x16xf32>
    %138 = vector.extract_strided_slice %130 {offsets = [1, 0], sizes = [8, 16], strides = [1, 1]} : vector<10x16xf32> to vector<8x16xf32>
    %cst_54 = arith.constant 7.500000e-01 : f32
    %139 = vector.broadcast %cst_54 : f32 to vector<8x16xf32>
    %140 = arith.mulf %138, %139 : vector<8x16xf32>
    %141 = vector.extract_strided_slice %130 {offsets = [2, 0], sizes = [8, 16], strides = [1, 1]} : vector<10x16xf32> to vector<8x16xf32>
    %cst_55 = arith.constant 2.500000e-01 : f32
    %142 = vector.broadcast %cst_55 : f32 to vector<8x16xf32>
    %143 = arith.mulf %141, %142 : vector<8x16xf32>
    %144 = arith.addf %140, %143 : vector<8x16xf32>
    %145 = vector.extract_strided_slice %127 {offsets = [0, 0], sizes = [8, 16], strides = [1, 1]} : vector<8x32xf32> to vector<8x16xf32>
    %146 = arith.addf %145, %137 : vector<8x16xf32>
    %c0_56 = arith.constant 0 : index
    %c0_57 = arith.constant 0 : index
    %c0_58 = arith.constant 0 : index
    %c0_59 = arith.constant 0 : index
    %147 = vector.load %arg6[%c0_56, %c0_57, %c0_58, %c0_59] : memref<1x3x8x32xf32, #tpu.memory_space<vmem>>, vector<1x1x8x16xf32>
    %148 = vector.shape_cast %147 : vector<1x1x8x16xf32> to vector<8x16xf32>
    %149 = vector.shape_cast %146 : vector<8x16xf32> to vector<1x1x8x16xf32>
    tpu.vector_store %arg6[%c0_56, %c0_57, %c0_58, %c0_59], %149 {strides = array<i32>} : memref<1x3x8x32xf32, #tpu.memory_space<vmem>>, vector<1x1x8x16xf32>,
    %150 = vector.extract_strided_slice %127 {offsets = [0, 16], sizes = [8, 16], strides = [1, 1]} : vector<8x32xf32> to vector<8x16xf32>
    %151 = arith.addf %150, %144 : vector<8x16xf32>
    %c0_60 = arith.constant 0 : index
    %c0_61 = arith.constant 0 : index
    %c0_62 = arith.constant 0 : index
    %c16 = arith.constant 16 : index
    %152 = vector.load %arg6[%c0_60, %c0_61, %c0_62, %c16] : memref<1x3x8x32xf32, #tpu.memory_space<vmem>>, vector<1x1x8x16xf32>
    %153 = vector.shape_cast %152 : vector<1x1x8x16xf32> to vector<8x16xf32>
    %154 = vector.shape_cast %151 : vector<8x16xf32> to vector<1x1x8x16xf32>
    tpu.vector_store %arg6[%c0_60, %c0_61, %c0_62, %c16], %154 {strides = array<i32>} : memref<1x3x8x32xf32, #tpu.memory_space<vmem>>, vector<1x1x8x16xf32>,
    %c3_i32_63 = arith.constant 3 : i32
    %155 = arith.muli %arg0, %c3_i32_63 : i32
    %c1_i32_64 = arith.constant 1 : i32
    %156 = arith.addi %155, %c1_i32_64 : i32
    %c5_i32_65 = arith.constant 5 : i32
    %157 = arith.muli %156, %c5_i32_65 : i32
    %c4_i32_66 = arith.constant 4 : i32
    %158 = arith.addi %157, %c4_i32_66 : i32
    %159 = arith.index_cast %158 : i32 to index
    %160 = memref.load %arg2[%159] : memref<30xf32, #tpu.memory_space<smem>>
    %161 = vector.broadcast %160 : f32 to vector<8x32xf32>
    %162 = arith.addf %110, %161 : vector<8x32xf32>
    %c1 = arith.constant 1 : index
    %163 = arith.index_cast %4 : i32 to index
    %c0_67 = arith.constant 0 : index
    %164 = vector.load %arg7[%c1, %163, %c0_67] : memref<3x10x16xf32, #tpu.memory_space<vmem>>, vector<1x10x16xf32>
    %165 = vector.shape_cast %164 : vector<1x10x16xf32> to vector<10x16xf32>
    %166 = vector.extract_strided_slice %165 {offsets = [0, 0], sizes = [8, 16], strides = [1, 1]} : vector<10x16xf32> to vector<8x16xf32>
    %cst_68 = arith.constant 2.500000e-01 : f32
    %167 = vector.broadcast %cst_68 : f32 to vector<8x16xf32>
    %168 = arith.mulf %166, %167 : vector<8x16xf32>
    %169 = vector.extract_strided_slice %165 {offsets = [1, 0], sizes = [8, 16], strides = [1, 1]} : vector<10x16xf32> to vector<8x16xf32>
    %cst_69 = arith.constant 7.500000e-01 : f32
    %170 = vector.broadcast %cst_69 : f32 to vector<8x16xf32>
    %171 = arith.mulf %169, %170 : vector<8x16xf32>
    %172 = arith.addf %168, %171 : vector<8x16xf32>
    %173 = vector.extract_strided_slice %165 {offsets = [1, 0], sizes = [8, 16], strides = [1, 1]} : vector<10x16xf32> to vector<8x16xf32>
    %cst_70 = arith.constant 7.500000e-01 : f32
    %174 = vector.broadcast %cst_70 : f32 to vector<8x16xf32>
    %175 = arith.mulf %173, %174 : vector<8x16xf32>
    %176 = vector.extract_strided_slice %165 {offsets = [2, 0], sizes = [8, 16], strides = [1, 1]} : vector<10x16xf32> to vector<8x16xf32>
    %cst_71 = arith.constant 2.500000e-01 : f32
    %177 = vector.broadcast %cst_71 : f32 to vector<8x16xf32>
    %178 = arith.mulf %176, %177 : vector<8x16xf32>
    %179 = arith.addf %175, %178 : vector<8x16xf32>
    %180 = vector.extract_strided_slice %162 {offsets = [0, 0], sizes = [8, 16], strides = [1, 1]} : vector<8x32xf32> to vector<8x16xf32>
    %181 = arith.addf %180, %172 : vector<8x16xf32>
    %c0_72 = arith.constant 0 : index
    %c1_73 = arith.constant 1 : index
    %c0_74 = arith.constant 0 : index
    %c0_75 = arith.constant 0 : index
    %182 = vector.load %arg6[%c0_72, %c1_73, %c0_74, %c0_75] : memref<1x3x8x32xf32, #tpu.memory_space<vmem>>, vector<1x1x8x16xf32>
    %183 = vector.shape_cast %182 : vector<1x1x8x16xf32> to vector<8x16xf32>
    %184 = vector.shape_cast %181 : vector<8x16xf32> to vector<1x1x8x16xf32>
    tpu.vector_store %arg6[%c0_72, %c1_73, %c0_74, %c0_75], %184 {strides = array<i32>} : memref<1x3x8x32xf32, #tpu.memory_space<vmem>>, vector<1x1x8x16xf32>,
    %185 = vector.extract_strided_slice %162 {offsets = [0, 16], sizes = [8, 16], strides = [1, 1]} : vector<8x32xf32> to vector<8x16xf32>
    %186 = arith.addf %185, %179 : vector<8x16xf32>
    %c0_76 = arith.constant 0 : index
    %c1_77 = arith.constant 1 : index
    %c0_78 = arith.constant 0 : index
    %c16_79 = arith.constant 16 : index
    %187 = vector.load %arg6[%c0_76, %c1_77, %c0_78, %c16_79] : memref<1x3x8x32xf32, #tpu.memory_space<vmem>>, vector<1x1x8x16xf32>
    %188 = vector.shape_cast %187 : vector<1x1x8x16xf32> to vector<8x16xf32>
    %189 = vector.shape_cast %186 : vector<8x16xf32> to vector<1x1x8x16xf32>
    tpu.vector_store %arg6[%c0_76, %c1_77, %c0_78, %c16_79], %189 {strides = array<i32>} : memref<1x3x8x32xf32, #tpu.memory_space<vmem>>, vector<1x1x8x16xf32>,
    %c3_i32_80 = arith.constant 3 : i32
    %190 = arith.muli %arg0, %c3_i32_80 : i32
    %c2_i32_81 = arith.constant 2 : i32
    %191 = arith.addi %190, %c2_i32_81 : i32
    %c5_i32_82 = arith.constant 5 : i32
    %192 = arith.muli %191, %c5_i32_82 : i32
    %c4_i32_83 = arith.constant 4 : i32
    %193 = arith.addi %192, %c4_i32_83 : i32
    %194 = arith.index_cast %193 : i32 to index
    %195 = memref.load %arg2[%194] : memref<30xf32, #tpu.memory_space<smem>>
    %196 = vector.broadcast %195 : f32 to vector<8x32xf32>
    %197 = arith.addf %119, %196 : vector<8x32xf32>
    %c2 = arith.constant 2 : index
    %198 = arith.index_cast %4 : i32 to index
    %c0_84 = arith.constant 0 : index
    %199 = vector.load %arg7[%c2, %198, %c0_84] : memref<3x10x16xf32, #tpu.memory_space<vmem>>, vector<1x10x16xf32>
    %200 = vector.shape_cast %199 : vector<1x10x16xf32> to vector<10x16xf32>
    %201 = vector.extract_strided_slice %200 {offsets = [0, 0], sizes = [8, 16], strides = [1, 1]} : vector<10x16xf32> to vector<8x16xf32>
    %cst_85 = arith.constant 2.500000e-01 : f32
    %202 = vector.broadcast %cst_85 : f32 to vector<8x16xf32>
    %203 = arith.mulf %201, %202 : vector<8x16xf32>
    %204 = vector.extract_strided_slice %200 {offsets = [1, 0], sizes = [8, 16], strides = [1, 1]} : vector<10x16xf32> to vector<8x16xf32>
    %cst_86 = arith.constant 7.500000e-01 : f32
    %205 = vector.broadcast %cst_86 : f32 to vector<8x16xf32>
    %206 = arith.mulf %204, %205 : vector<8x16xf32>
    %207 = arith.addf %203, %206 : vector<8x16xf32>
    %208 = vector.extract_strided_slice %200 {offsets = [1, 0], sizes = [8, 16], strides = [1, 1]} : vector<10x16xf32> to vector<8x16xf32>
    %cst_87 = arith.constant 7.500000e-01 : f32
    %209 = vector.broadcast %cst_87 : f32 to vector<8x16xf32>
    %210 = arith.mulf %208, %209 : vector<8x16xf32>
    %211 = vector.extract_strided_slice %200 {offsets = [2, 0], sizes = [8, 16], strides = [1, 1]} : vector<10x16xf32> to vector<8x16xf32>
    %cst_88 = arith.constant 2.500000e-01 : f32
    %212 = vector.broadcast %cst_88 : f32 to vector<8x16xf32>
    %213 = arith.mulf %211, %212 : vector<8x16xf32>
    %214 = arith.addf %210, %213 : vector<8x16xf32>
    %215 = vector.extract_strided_slice %197 {offsets = [0, 0], sizes = [8, 16], strides = [1, 1]} : vector<8x32xf32> to vector<8x16xf32>
    %216 = arith.addf %215, %207 : vector<8x16xf32>
    %c0_89 = arith.constant 0 : index
    %c2_90 = arith.constant 2 : index
    %c0_91 = arith.constant 0 : index
    %c0_92 = arith.constant 0 : index
    %217 = vector.load %arg6[%c0_89, %c2_90, %c0_91, %c0_92] : memref<1x3x8x32xf32, #tpu.memory_space<vmem>>, vector<1x1x8x16xf32>
    %218 = vector.shape_cast %217 : vector<1x1x8x16xf32> to vector<8x16xf32>
    %219 = vector.shape_cast %216 : vector<8x16xf32> to vector<1x1x8x16xf32>
    tpu.vector_store %arg6[%c0_89, %c2_90, %c0_91, %c0_92], %219 {strides = array<i32>} : memref<1x3x8x32xf32, #tpu.memory_space<vmem>>, vector<1x1x8x16xf32>,
    %220 = vector.extract_strided_slice %197 {offsets = [0, 16], sizes = [8, 16], strides = [1, 1]} : vector<8x32xf32> to vector<8x16xf32>
    %221 = arith.addf %220, %214 : vector<8x16xf32>
    %c0_93 = arith.constant 0 : index
    %c2_94 = arith.constant 2 : index
    %c0_95 = arith.constant 0 : index
    %c16_96 = arith.constant 16 : index
    %222 = vector.load %arg6[%c0_93, %c2_94, %c0_95, %c16_96] : memref<1x3x8x32xf32, #tpu.memory_space<vmem>>, vector<1x1x8x16xf32>
    %223 = vector.shape_cast %222 : vector<1x1x8x16xf32> to vector<8x16xf32>
    %224 = vector.shape_cast %221 : vector<8x16xf32> to vector<1x1x8x16xf32>
    tpu.vector_store %arg6[%c0_93, %c2_94, %c0_95, %c16_96], %224 {strides = array<i32>} : memref<1x3x8x32xf32, #tpu.memory_space<vmem>>, vector<1x1x8x16xf32>,
    return
  }
  func.func @transform_0(%arg0: i32, %arg1: i32) -> i32 {
    %c0_i32 = arith.constant 0 : i32
    %c0_i32_0 = arith.constant 0 : i32
    return %c0_i32 : i32
  }
  func.func @transform_1(%arg0: i32, %arg1: i32) -> (i32, i32, i32, i32) {
    %c0_i32 = arith.constant 0 : i32
    %c0_i32_0 = arith.constant 0 : i32
    %c0_i32_1 = arith.constant 0 : i32
    return %arg0, %c0_i32, %arg1, %c0_i32_0 : i32, i32, i32, i32
  }
  func.func @transform_2(%arg0: i32, %arg1: i32) -> (i32, i32, i32, i32) {
    %c0_i32 = arith.constant 0 : i32
    %c0_i32_0 = arith.constant 0 : i32
    %c0_i32_1 = arith.constant 0 : i32
    %c0_i32_2 = arith.constant 0 : i32
    return %arg0, %c0_i32, %c0_i32_0, %c0_i32_1 : i32, i32, i32, i32
  }
  func.func @transform_3(%arg0: i32, %arg1: i32) -> (i32, i32) {
    %c0_i32 = arith.constant 0 : i32
    %c0_i32_0 = arith.constant 0 : i32
    %c0_i32_1 = arith.constant 0 : i32
    return %c0_i32, %c0_i32_0 : i32, i32
  }
  func.func @transform_4(%arg0: i32, %arg1: i32) -> (i32, i32, i32, i32) {
    %c0_i32 = arith.constant 0 : i32
    %c0_i32_0 = arith.constant 0 : i32
    %c0_i32_1 = arith.constant 0 : i32
    return %arg0, %c0_i32, %arg1, %c0_i32_0 : i32, i32, i32, i32
  }
}

</mosaic_0001>

<llo_original>
// kernel: to_rgb_forward.1
$region0: #{to_rgb_forward.1}
  #allocation0 [shape = 'u32[]', space=smem, size = 0x4, offset = 0x4, fixed_abs, tag = 'smem constant byte address 0x4 - core index']
  #allocation1 [shape = 'u32[144,128]{1,0:T(1,128)}', space=vmem, size = 0x12000, scoped, tag = 'internal scratch']
  #allocation2 [shape = 'f32[3,10,16]{2,1,0:T(8,128)}', space=vmem, size = 0x6000, scoped, tag = 'scratch operand']
  %s0 = inlined_call_operand.vmem [shape: f32[30], index: 0, kind: input, shape index: {}]
  %s1 = inlined_call_operand.vmem [shape: f32[2,4,8,32], index: 1, kind: input, shape index: {}]
  %s2 = inlined_call_operand.vmem [shape: f32[2,3,8,8], index: 2, kind: input, shape index: {}]
  %s3 = inlined_call_operand.vmem [shape: f32[8,16], index: 3, kind: input, shape index: {}]
  %s4 = inlined_call_operand.vmem [shape: f32[2,3,8,32], index: 4, kind: output, shape index: {}]
  %s5 = sld [smem:[#allocation0]]
  $region57: #{to_rgb_forward.1} parent=0
    _
  %s7 = ssub.s32 1, %s5
  %s8 = scalar_select 0, %s7, %s5
  $region1: #{to_rgb_forward.1} parent=0
    #allocation3 [shape = 'u8[512]{0}', space=smem, size = 0x200, scoped, tag = 'input window, operand 0, single buffered']
    #allocation4 [shape = 's32[2]{0}', space=sflag, size = 0x8, scoped, tag = 'scoped memory for to_rgb_forward.1']
    %9 = vsyncpa [#allocation4], 0
    loop: start=0, step=1, limit=4
    $region2: #{to_rgb_forward.1} parent=1 // loop_pre_header
      _
    $region3: #{to_rgb_forward.1} parent=1 // loop_header
      %s11 = sphi 0, %s15
      %p12 = scmp.ge.s32.totalorder %s11, 4
      %s18 = sphi 0, %s30
      %s19 = sphi 0, %s26
      %s20 = sphi 0, %s18
      %s21 = sphi 0, %s19
      %s22 = sphi 0, %s20
      %s23 = sphi 0, %s21
      %s31 = sphi 0, %s31
      %s33 = sphi 0, %s31
      %s34 = sphi 0, %s33
      %s48 = sphi 0, %s34
      %s56 = sphi 0, %s58
      %s59 = sphi 0, %s56
      %s60 = sphi 0, %s59
      %s76 = sphi 0, %s60
      %s82 = sphi 0, %s84
      %s85 = sphi 0, %s82
      %s86 = sphi 0, %s85
      %s102 = sphi 0, %s86
      %s106 = sphi 0, %s106
      %s108 = sphi 0, %s106
      %s109 = sphi 0, %s108
      %s123 = sphi 0, %s109
      %s131 = sphi 0, %s133
      %s134 = sphi 0, %s131
      %s135 = sphi 0, %s134
      %s151 = sphi 0, %s135
    $region4: #{to_rgb_forward.1} parent=1 // loop_header_branch
      %14 = sbr.rel (%p12) target = $region8
    $region5: #{to_rgb_forward.1} parent=1 // loop_body
      %s16 = ssub.s32 %s11, 1
      %s17 = ssub.s32 %s11, 2
      %s24 = sadd.s32 1, %s19
      %p25 = scmp.ge.s32.totalorder %s24, 1
      %s26 = scalar_select %p25, 0, %s24
      %s27 = sadd.s32 1, %s18
      %s28 = scalar_select %p25, %s27, %s18
      %p29 = scmp.ge.s32.totalorder %s28, 2
      %s30 = scalar_select %p29, 0, %s28
      %s32 = sadd.s32 %s31, 1
      %p35 = scmp.eq.s32.totalorder %s11, 1
      %p36 = scmp.ne.s32.totalorder %s31, %s33
      %p37 = scmp.eq.s32.totalorder %s11, 0
      %p38 = por %p36, %p37
      %p39 = scmp.ne.s32.totalorder %s31, %s33
      %p40 = scmp.eq.s32.totalorder %s16, 1
      %p41 = por %p39, %p40
      %p42 = scmp.ne.s32.totalorder %s33, %s34
      %p43 = scmp.eq.s32.totalorder %s16, 0
      %p44 = por %p42, %p43
      %p45 = scmp.ne.s32.totalorder %s33, %s34
      %p46 = scmp.eq.s32.totalorder %s17, 1
      %p47 = por %p45, %p46
      %p49 = scmp.ne.s32.totalorder %s34, %s48
      %p50 = scmp.eq.s32.totalorder %s17, 0
      %p51 = por %p49, %p50
      %s52 = ssub.s32 %s18, %s30
      %s53 = ssub.s32 %s19, %s26
      %s54 = sor.u32 %s52, %s53
      %p55 = scmp.eq.s32.totalorder %s54, 0
      %s57 = sadd.s32 %s56, 1
      %s58 = scalar_select %p55, %s56, %s57
      %p61 = pneg %p55
      %p62 = scmp.eq.s32.totalorder %s11, 1
      %p63 = por %p61, %p62
      %p64 = scmp.ne.s32.totalorder %s56, %s59
      %p65 = scmp.eq.s32.totalorder %s11, 0
      %p66 = por %p64, %p65
      %p67 = scmp.ne.s32.totalorder %s56, %s59
      %p68 = scmp.eq.s32.totalorder %s16, 1
      %p69 = por %p67, %p68
      %p70 = scmp.ne.s32.totalorder %s59, %s60
      %p71 = scmp.eq.s32.totalorder %s16, 0
      %p72 = por %p70, %p71
      %p73 = scmp.ne.s32.totalorder %s59, %s60
      %p74 = scmp.eq.s32.totalorder %s17, 1
      %p75 = por %p73, %p74
      %p77 = scmp.ne.s32.totalorder %s60, %s76
      %p78 = scmp.eq.s32.totalorder %s17, 0
      %p79 = por %p77, %p78
      %s80 = ssub.s32 %s18, %s30
      %p81 = scmp.eq.s32.totalorder %s80, 0
      %s83 = sadd.s32 %s82, 1
      %s84 = scalar_select %p81, %s82, %s83
      %p87 = pneg %p81
      %p88 = scmp.eq.s32.totalorder %s11, 1
      %p89 = por %p87, %p88
      %p90 = scmp.ne.s32.totalorder %s82, %s85
      %p91 = scmp.eq.s32.totalorder %s11, 0
      %p92 = por %p90, %p91
      %p93 = scmp.ne.s32.totalorder %s82, %s85
      %p94 = scmp.eq.s32.totalorder %s16, 1
      %p95 = por %p93, %p94
      %p96 = scmp.ne.s32.totalorder %s85, %s86
      %p97 = scmp.eq.s32.totalorder %s16, 0
      %p98 = por %p96, %p97
      %p99 = scmp.ne.s32.totalorder %s85, %s86
      %p100 = scmp.eq.s32.totalorder %s17, 1
      %p101 = por %p99, %p100
      %p103 = scmp.ne.s32.totalorder %s86, %s102
      %p104 = scmp.eq.s32.totalorder %s17, 0
      %p105 = por %p103, %p104
      %s107 = sadd.s32 %s106, 1
      %p110 = scmp.eq.s32.totalorder %s11, 1
      %p111 = scmp.ne.s32.totalorder %s106, %s108
      %p112 = scmp.eq.s32.totalorder %s11, 0
      %p113 = por %p111, %p112
      %p114 = scmp.ne.s32.totalorder %s106, %s108
      %p115 = scmp.eq.s32.totalorder %s16, 1
      %p116 = por %p114, %p115
      %p117 = scmp.ne.s32.totalorder %s108, %s109
      %p118 = scmp.eq.s32.totalorder %s16, 0
      %p119 = por %p117, %p118
      %p120 = scmp.ne.s32.totalorder %s108, %s109
      %p121 = scmp.eq.s32.totalorder %s17, 1
      %p122 = por %p120, %p121
      %p124 = scmp.ne.s32.totalorder %s109, %s123
      %p125 = scmp.eq.s32.totalorder %s17, 0
      %p126 = por %p124, %p125
      %s127 = ssub.s32 %s18, %s30
      %s128 = ssub.s32 %s19, %s26
      %s129 = sor.u32 %s127, %s128
      %p130 = scmp.eq.s32.totalorder %s129, 0
      %s132 = sadd.s32 %s131, 1
      %s133 = scalar_select %p130, %s131, %s132
      %p136 = pneg %p130
      %p137 = scmp.eq.s32.totalorder %s11, 1
      %p138 = por %p136, %p137
      %p139 = scmp.ne.s32.totalorder %s131, %s134
      %p140 = scmp.eq.s32.totalorder %s11, 0
      %p141 = por %p139, %p140
      %p142 = scmp.ne.s32.totalorder %s131, %s134
      %p143 = scmp.eq.s32.totalorder %s16, 1
      %p144 = por %p142, %p143
      %p145 = scmp.ne.s32.totalorder %s134, %s135
      %p146 = scmp.eq.s32.totalorder %s16, 0
      %p147 = por %p145, %p146
      %p148 = scmp.ne.s32.totalorder %s134, %s135
      %p149 = scmp.eq.s32.totalorder %s17, 1
      %p150 = por %p148, %p149
      %p152 = scmp.ne.s32.totalorder %s135, %s151
      %p153 = scmp.eq.s32.totalorder %s17, 0
      %p154 = por %p152, %p153
      %p155 = scmp.le.s32.totalorder 1, %s11
      %p156 = scmp.lt.s32.totalorder %s11, 3
      %p157 = pnand %p155, %p156
      %p158 = pneg %p157
      // Predicated region
      $region9: #{to_rgb_forward.1} parent=5 // pred_check
        _
      $region10: #{to_rgb_forward.1} parent=5 // pred_check_branch
        %160 = sbr.rel (%p157) target = $region12
      $region11: #{to_rgb_forward.1} parent=5 // pred_region
        %s161 = ssub.s32 %s11, 1
        // Predicated region
        $region13: #{to_rgb_forward.1} parent=11 // pred_check
          %p162 = pneg %p44
        $region14: #{to_rgb_forward.1} parent=11 // pred_check_branch
          %164 = sbr.rel (%p162) target = $region16
        $region15: #{to_rgb_forward.1} parent=11 // pred_region
          %s166 = ssub.s32 16, 16
          %167 = vsyncadd [#allocation4], %s166
          %s169 = sshll.u32 %s0, 4
          %s170 = int_to_ptr.vmem [resolvable:$true] %s169
          %172 = dma.vmem_to_smem %s170, 16, [#allocation3], [#allocation4]
        $region16: #{to_rgb_forward.1} parent=11 // pred_fallthru
          _
        // Predicated region
        $region17: #{to_rgb_forward.1} parent=11 // pred_check
          %p173 = pneg %p119
        $region18: #{to_rgb_forward.1} parent=11 // pred_check_branch
          %175 = sbr.rel (%p173) target = $region20
        $region19: #{to_rgb_forward.1} parent=11 // pred_region
          _
        $region20: #{to_rgb_forward.1} parent=11 // pred_fallthru
          _
      $region12: #{to_rgb_forward.1} parent=5 // pred_fallthru
        _
      %p176 = scmp.lt.s32.totalorder %s11, 2
      // Predicated region
      $region21: #{to_rgb_forward.1} parent=5 // pred_check
        %p177 = pneg %p176
      $region22: #{to_rgb_forward.1} parent=5 // pred_check_branch
        %179 = sbr.rel (%p177) target = $region24
      $region23: #{to_rgb_forward.1} parent=5 // pred_region
        // Predicated region
        $region25: #{to_rgb_forward.1} parent=23 // pred_check
          %p180 = pneg %p66
        $region26: #{to_rgb_forward.1} parent=23 // pred_check_branch
          %182 = sbr.rel (%p180) target = $region28
        $region27: #{to_rgb_forward.1} parent=23 // pred_region
          %p183 = scmp.lt.s32.totalorder %s18, 1
          %s184 = scalar_select %p183, %s18, 1
          %p185 = scmp.lt.s32.totalorder %s19, 0
          %s186 = scalar_select %p185, %s19, 0
          %s187 = smul.addr %s184, 4
          %s188 = sadd.s32 %s186, %s187
          %s189 = smul.addr %s188, 8
          %s190 = scalar_lea.vmem %s1, %s189
        $region28: #{to_rgb_forward.1} parent=23 // pred_fallthru
          _
        // Predicated region
        $region29: #{to_rgb_forward.1} parent=23 // pred_check
          %p191 = pneg %p92
        $region30: #{to_rgb_forward.1} parent=23 // pred_check_branch
          %193 = sbr.rel (%p191) target = $region32
        $region31: #{to_rgb_forward.1} parent=23 // pred_region
          %p194 = scmp.lt.s32.totalorder %s18, 1
          %s195 = scalar_select %p194, %s18, 1
          %s196 = smul.addr %s195, 3
          %s197 = smul.addr %s196, 8
          %s198 = scalar_lea.vmem %s2, %s197
        $region32: #{to_rgb_forward.1} parent=23 // pred_fallthru
          _
      $region24: #{to_rgb_forward.1} parent=5 // pred_fallthru
        _
      %p199 = scmp.le.s32.totalorder 1, %s11
      %p200 = scmp.lt.s32.totalorder %s11, 3
      %p201 = pnand %p199, %p200
      %p202 = pneg %p201
      // Predicated region
      $region33: #{to_rgb_forward.1} parent=5 // pred_check
        _
      $region34: #{to_rgb_forward.1} parent=5 // pred_check_branch
        %204 = sbr.rel (%p201) target = $region36
      $region35: #{to_rgb_forward.1} parent=5 // pred_region
        %s205 = ssub.s32 %s11, 1
        // Predicated region
        $region37: #{to_rgb_forward.1} parent=35 // pred_check
          %p206 = pneg %p44
        $region38: #{to_rgb_forward.1} parent=35 // pred_check_branch
          %208 = sbr.rel (%p206) target = $region40
        $region39: #{to_rgb_forward.1} parent=35 // pred_region
          %209 = dma.done [#allocation4], 16
        $region40: #{to_rgb_forward.1} parent=35 // pred_fallthru
          _
        %210 = sfence
        %p211 = pneg %p44
        %p212 = pneg %p41
        %p213 = scmp.lt.s32.totalorder %s20, 1
        %s214 = scalar_select %p213, %s20, 1
        %p215 = scmp.lt.s32.totalorder %s21, 0
        %s216 = scalar_select %p215, %s21, 0
        %s217 = smul.addr %s214, 4
        %s218 = sadd.s32 %s216, %s217
        %s219 = smul.addr %s218, 8
        %s220 = scalar_lea.vmem %s1, %s219
        %p221 = pneg %p72
        %p222 = pneg %p69
        %p223 = scmp.lt.s32.totalorder %s20, 1
        %s224 = scalar_select %p223, %s20, 1
        %s225 = smul.addr %s224, 3
        %s226 = smul.addr %s225, 8
        %s227 = scalar_lea.vmem %s2, %s226
        %p228 = pneg %p98
        %p229 = pneg %p95
        %p230 = pneg %p119
        %p231 = pneg %p116
        %p232 = pneg %p147
        %p233 = pneg %p144
        %p234 = scmp.lt.s32.totalorder %s20, 1
        %s235 = scalar_select %p234, %s20, 1
        %p236 = scmp.lt.s32.totalorder %s21, 0
        %s237 = scalar_select %p236, %s21, 0
        %s238 = smul.addr %s235, 3
        %s239 = sadd.s32 %s237, %s238
        %s240 = smul.addr %s239, 8
        %s241 = scalar_lea.vmem %s4, %s240
        %p242 = scmp.lt.s32.totalorder %s20, 1
        %s243 = scalar_select %p242, %s20, 1
        %p244 = scmp.lt.s32.totalorder %s21, 0
        %s245 = scalar_select %p244, %s21, 0
        %s246 = smul.addr %s243, 4
        %s247 = sadd.s32 %s245, %s246
        %s248 = smul.addr %s247, 8
        %s249 = scalar_lea.vmem %s1, %s248
        %p250 = scmp.lt.s32.totalorder %s20, 1
        %s251 = scalar_select %p250, %s20, 1
        %s252 = smul.addr %s251, 3
        %s253 = smul.addr %s252, 8
        %s254 = scalar_lea.vmem %s2, %s253
        %p255 = scmp.lt.s32.totalorder %s20, 1
        %s256 = scalar_select %p255, %s20, 1
        %p257 = scmp.lt.s32.totalorder %s21, 0
        %s258 = scalar_select %p257, %s21, 0
        %s259 = smul.addr %s256, 3
        %s260 = sadd.s32 %s258, %s259
        %s261 = smul.addr %s260, 8
        %s262 = scalar_lea.vmem %s4, %s261
        %p263 = scmp.eq.s32.totalorder %s21, 0
        // Predicated region
        $region41: #{to_rgb_forward.1} parent=35 // pred_check
          %p264 = pneg %p263
        $region42: #{to_rgb_forward.1} parent=35 // pred_check_branch
          %266 = sbr.rel (%p264) target = $region44
        $region43: #{to_rgb_forward.1} parent=35 // pred_region
          %v267 = vld [vmem:[%s3] sm:$0xff]
          %vm268 = vcmask 122880
          %269 = vst.msk [vmem:[#allocation2] sm:$0x1] %vm268, 0.0
          %270 = vst.msk [vmem:[#allocation2 + $0x9] sm:$0x1] %vm268, 0.0
          %v271 = vld [vmem:[%s254] sm:$0xff]
          %vm272 = vcmask 64512
          %v274 = vsel %vm272, %v271, 0
          %276 = vmatprep.subr.mxu0 0.0
          %v277 = vand.u32 %v267, 4294901760
          %278 = vmatpush1.msra.mxu0 %v277
          %279 = vmatprep.subr.mxu0 0.0
          %280 = vmatpush1.msra.mxu0 0.0
          %281 = vmatprep.subr.mxu0 0.0
          %282 = vmatpush1.msra.mxu0 0.0
          %283 = vmatprep.subr.mxu0 0.0
          %284 = vmatpush1.msra.mxu0 0.0
          %285 = vmatprep.subr.mxu0 0.0
          %286 = vmatpush1.msra.mxu0 0.0
          %287 = vmatprep.subr.mxu0 0.0
          %288 = vmatpush1.msra.mxu0 0.0
          %289 = vmatprep.subr.mxu0 0.0
          %290 = vmatpush1.msra.mxu0 0.0
          %291 = vmatprep.subr.mxu0 0.0
          %292 = vmatpush1.msra.mxu0 0.0
          %293 = vmatprep.subr.mxu0 0.0
          %294 = vmatpush1.msra.mxu0 0.0
          %295 = vmatprep.subr.mxu0 0.0
          %296 = vmatpush1.msra.mxu0 0.0
          %297 = vmatprep.subr.mxu0 0.0
          %298 = vmatpush1.msra.mxu0 0.0
          %299 = vmatprep.subr.mxu0 0.0
          %300 = vmatpush1.msra.mxu0 0.0
          %301 = vmatprep.subr.mxu0 0.0
          %302 = vmatpush1.msra.mxu0 0.0
          %303 = vmatprep.subr.mxu0 0.0
          %304 = vmatpush1.msra.mxu0 0.0
          %305 = vmatprep.subr.mxu0 0.0
          %306 = vmatpush1.msra.mxu0 0.0
          %307 = vmatprep.subr.mxu0 0.0
          %308 = vmatpush1.msra.mxu0 0.0
          %309 = vmatprep.subr.mxu0 0.0
          %310 = vmatpush1.msra.mxu0 0.0
          %311 = vmatprep.subr.mxu0 0.0
          %312 = vmatpush1.msra.mxu0 0.0
          %313 = vmatprep.subr.mxu0 0.0
          %314 = vmatpush1.msra.mxu0 0.0
          %315 = vmatprep.subr.mxu0 0.0
          %316 = vmatpush1.msra.mxu0 0.0
          %317 = vmatprep.subr.mxu0 0.0
          %318 = vmatpush1.msra.mxu0 0.0
          %319 = vmatprep.subr.mxu0 0.0
          %320 = vmatpush1.msra.mxu0 0.0
          %321 = vmatprep.subr.mxu0 0.0
          %322 = vmatpush1.msra.mxu0 0.0
          %323 = vmatprep.subr.mxu0 0.0
          %324 = vmatpush1.msra.mxu0 0.0
          %325 = vmatprep.subr.mxu0 0.0
          %326 = vmatpush1.msra.mxu0 0.0
          %327 = vmatprep.subr.mxu0 0.0
          %328 = vmatpush1.msra.mxu0 0.0
          %329 = vmatprep.subr.mxu0 0.0
          %330 = vmatpush1.msra.mxu0 0.0
          %331 = vmatprep.subr.mxu0 0.0
          %332 = vmatpush1.msra.mxu0 0.0
          %333 = vmatprep.subr.mxu0 0.0
          %334 = vmatpush1.msra.mxu0 0.0
          %335 = vmatprep.subr.mxu0 0.0
          %336 = vmatpush1.msra.mxu0 0.0
          %337 = vmatprep.subr.mxu0 0.0
          %338 = vmatpush1.msra.mxu0 0.0
          %339 = vmatprep.subr.mxu0 0.0
          %340 = vmatpush1.msra.mxu0 0.0
          %341 = vmatprep.mubr.f32.mxu0 0.0
          %v342 = vand.u32 %v274, 4294901760
          %v343 = vsub.f32 %v274, %v342
          %v344 = vand.u32 %v343, 4294901760
          %v345 = vsub.f32 %v343, %v344
          %v346 = vand.u32 %v345, 4294901760
          %347 = vmatmul.mubr.f32.gmra.mrb[0].mxu0 %v346
          %v348 = vpop.f32.mrb[0].mxu0
          %v349 = vadd.f32 0.0, %v348
          %v350 = vpop.f32.mrb[0].mxu0
          %351 = vdwg.mxu0
          %352 = vmatprep.subr.mxu0 0.0
          %v353 = vand.u32 %v267, 4294901760
          %v354 = vsub.f32 %v267, %v353
          %v355 = vand.u32 %v354, 4294901760
          %v356 = vsub.f32 %v354, %v355
          %v357 = vand.u32 %v356, 4294901760
          %358 = vmatpush1.msra.mxu0 %v357
          %359 = vmatprep.subr.mxu0 0.0
          %360 = vmatpush1.msra.mxu0 0.0
          %361 = vmatprep.subr.mxu0 0.0
          %362 = vmatpush1.msra.mxu0 0.0
          %363 = vmatprep.subr.mxu0 0.0
          %364 = vmatpush1.msra.mxu0 0.0
          %365 = vmatprep.subr.mxu0 0.0
          %366 = vmatpush1.msra.mxu0 0.0
          %367 = vmatprep.subr.mxu0 0.0
          %368 = vmatpush1.msra.mxu0 0.0
          %369 = vmatprep.subr.mxu0 0.0
          %370 = vmatpush1.msra.mxu0 0.0
          %371 = vmatprep.subr.mxu0 0.0
          %372 = vmatpush1.msra.mxu0 0.0
          %373 = vmatprep.subr.mxu0 0.0
          %374 = vmatpush1.msra.mxu0 0.0
          %375 = vmatprep.subr.mxu0 0.0
          %376 = vmatpush1.msra.mxu0 0.0
          %377 = vmatprep.subr.mxu0 0.0
          %378 = vmatpush1.msra.mxu0 0.0
          %379 = vmatprep.subr.mxu0 0.0
          %380 = vmatpush1.msra.mxu0 0.0
          %381 = vmatprep.subr.mxu0 0.0
          %382 = vmatpush1.msra.mxu0 0.0
          %383 = vmatprep.subr.mxu0 0.0
          %384 = vmatpush1.msra.mxu0 0.0
          %385 = vmatprep.subr.mxu0 0.0
          %386 = vmatpush1.msra.mxu0 0.0
          %387 = vmatprep.subr.mxu0 0.0
          %388 = vmatpush1.msra.mxu0 0.0
          %389 = vmatprep.subr.mxu0 0.0
          %390 = vmatpush1.msra.mxu0 0.0
          %391 = vmatprep.subr.mxu0 0.0
          %392 = vmatpush1.msra.mxu0 0.0
          %393 = vmatprep.subr.mxu0 0.0
          %394 = vmatpush1.msra.mxu0 0.0
          %395 = vmatprep.subr.mxu0 0.0
          %396 = vmatpush1.msra.mxu0 0.0
          %397 = vmatprep.subr.mxu0 0.0
          %398 = vmatpush1.msra.mxu0 0.0
          %399 = vmatprep.subr.mxu0 0.0
          %400 = vmatpush1.msra.mxu0 0.0
          %401 = vmatprep.subr.mxu0 0.0
          %402 = vmatpush1.msra.mxu0 0.0
          %403 = vmatprep.subr.mxu0 0.0
          %404 = vmatpush1.msra.mxu0 0.0
          %405 = vmatprep.subr.mxu0 0.0
          %406 = vmatpush1.msra.mxu0 0.0
          %407 = vmatprep.subr.mxu0 0.0
          %408 = vmatpush1.msra.mxu0 0.0
          %409 = vmatprep.subr.mxu0 0.0
          %410 = vmatpush1.msra.mxu0 0.0
          %411 = vmatprep.subr.mxu0 0.0
          %412 = vmatpush1.msra.mxu0 0.0
          %413 = vmatprep.subr.mxu0 0.0
          %414 = vmatpush1.msra.mxu0 0.0
          %415 = vmatprep.subr.mxu0 0.0
          %416 = vmatpush1.msra.mxu0 0.0
          %417 = vmatprep.subr.mxu0 0.0
          %418 = vmatpush1.msra.mxu0 0.0
          %419 = vmatprep.subr.mxu0 0.0
          %420 = vmatpush1.msra.mxu0 0.0
          %421 = vmatprep.mubr.f32.mxu0 0.0
          %v422 = vand.u32 %v274, 4294901760
          %423 = vmatmul.mubr.f32.gmra.mrb[0].mxu0 %v422
          %v424 = vpop.f32.mrb[0].mxu0
          %v425 = vadd.f32 %v349, %v424
          %v426 = vpop.f32.mrb[0].mxu0
          %427 = vdwg.mxu0
          %428 = vmatprep.subr.mxu0 0.0
          %v429 = vand.u32 %v267, 4294901760
          %v430 = vsub.f32 %v267, %v429
          %431 = vmatpush1.msra.mxu0 %v430
          %432 = vmatprep.subr.mxu0 0.0
          %433 = vmatpush1.msra.mxu0 0.0
          %434 = vmatprep.subr.mxu0 0.0
          %435 = vmatpush1.msra.mxu0 0.0
          %436 = vmatprep.subr.mxu0 0.0
          %437 = vmatpush1.msra.mxu0 0.0
          %438 = vmatprep.subr.mxu0 0.0
          %439 = vmatpush1.msra.mxu0 0.0
          %440 = vmatprep.subr.mxu0 0.0
          %441 = vmatpush1.msra.mxu0 0.0
          %442 = vmatprep.subr.mxu0 0.0
          %443 = vmatpush1.msra.mxu0 0.0
          %444 = vmatprep.subr.mxu0 0.0
          %445 = vmatpush1.msra.mxu0 0.0
          %446 = vmatprep.subr.mxu0 0.0
          %447 = vmatpush1.msra.mxu0 0.0
          %448 = vmatprep.subr.mxu0 0.0
          %449 = vmatpush1.msra.mxu0 0.0
          %450 = vmatprep.subr.mxu0 0.0
          %451 = vmatpush1.msra.mxu0 0.0
          %452 = vmatprep.subr.mxu0 0.0
          %453 = vmatpush1.msra.mxu0 0.0
          %454 = vmatprep.subr.mxu0 0.0
          %455 = vmatpush1.msra.mxu0 0.0
          %456 = vmatprep.subr.mxu0 0.0
          %457 = vmatpush1.msra.mxu0 0.0
          %458 = vmatprep.subr.mxu0 0.0
          %459 = vmatpush1.msra.mxu0 0.0
          %460 = vmatprep.subr.mxu0 0.0
          %461 = vmatpush1.msra.mxu0 0.0
          %462 = vmatprep.subr.mxu0 0.0
          %463 = vmatpush1.msra.mxu0 0.0
          %464 = vmatprep.subr.mxu0 0.0
          %465 = vmatpush1.msra.mxu0 0.0
          %466 = vmatprep.subr.mxu0 0.0
          %467 = vmatpush1.msra.mxu0 0.0
          %468 = vmatprep.subr.mxu0 0.0
          %469 = vmatpush1.msra.mxu0 0.0
          %470 = vmatprep.subr.mxu0 0.0
          %471 = vmatpush1.msra.mxu0 0.0
          %472 = vmatprep.subr.mxu0 0.0
          %473 = vmatpush1.msra.mxu0 0.0
          %474 = vmatprep.subr.mxu0 0.0
          %475 = vmatpush1.msra.mxu0 0.0
          %476 = vmatprep.subr.mxu0 0.0
          %477 = vmatpush1.msra.mxu0 0.0
          %478 = vmatprep.subr.mxu0 0.0
          %479 = vmatpush1.msra.mxu0 0.0
          %480 = vmatprep.subr.mxu0 0.0
          %481 = vmatpush1.msra.mxu0 0.0
          %482 = vmatprep.subr.mxu0 0.0
          %483 = vmatpush1.msra.mxu0 0.0
          %484 = vmatprep.subr.mxu0 0.0
          %485 = vmatpush1.msra.mxu0 0.0
          %486 = vmatprep.subr.mxu0 0.0
          %487 = vmatpush1.msra.mxu0 0.0
          %488 = vmatprep.subr.mxu0 0.0
          %489 = vmatpush1.msra.mxu0 0.0
          %490 = vmatprep.subr.mxu0 0.0
          %491 = vmatpush1.msra.mxu0 0.0
          %492 = vmatprep.subr.mxu0 0.0
          %493 = vmatpush1.msra.mxu0 0.0
          %494 = vmatprep.mubr.f32.mxu0 0.0
          %v495 = vand.u32 %v274, 4294901760
          %v496 = vsub.f32 %v274, %v495
          %497 = vmatmul.mubr.f32.gmra.mrb[0].mxu0 %v496
          %v498 = vpop.f32.mrb[0].mxu0
          %v499 = vadd.f32 %v425, %v498
          %v500 = vpop.f32.mrb[0].mxu0
          %501 = vdwg.mxu0
          %502 = vmatprep.subr.mxu0 0.0
          %v503 = vand.u32 %v267, 4294901760
          %504 = vmatpush1.msra.mxu0 %v503
          %505 = vmatprep.subr.mxu0 0.0
          %506 = vmatpush1.msra.mxu0 0.0
          %507 = vmatprep.subr.mxu0 0.0
          %508 = vmatpush1.msra.mxu0 0.0
          %509 = vmatprep.subr.mxu0 0.0
          %510 = vmatpush1.msra.mxu0 0.0
          %511 = vmatprep.subr.mxu0 0.0
          %512 = vmatpush1.msra.mxu0 0.0
          %513 = vmatprep.subr.mxu0 0.0
          %514 = vmatpush1.msra.mxu0 0.0
          %515 = vmatprep.subr.mxu0 0.0
          %516 = vmatpush1.msra.mxu0 0.0
          %517 = vmatprep.subr.mxu0 0.0
          %518 = vmatpush1.msra.mxu0 0.0
          %519 = vmatprep.subr.mxu0 0.0
          %520 = vmatpush1.msra.mxu0 0.0
          %521 = vmatprep.subr.mxu0 0.0
          %522 = vmatpush1.msra.mxu0 0.0
          %523 = vmatprep.subr.mxu0 0.0
          %524 = vmatpush1.msra.mxu0 0.0
          %525 = vmatprep.subr.mxu0 0.0
          %526 = vmatpush1.msra.mxu0 0.0
          %527 = vmatprep.subr.mxu0 0.0
          %528 = vmatpush1.msra.mxu0 0.0
          %529 = vmatprep.subr.mxu0 0.0
          %530 = vmatpush1.msra.mxu0 0.0
          %531 = vmatprep.subr.mxu0 0.0
          %532 = vmatpush1.msra.mxu0 0.0
          %533 = vmatprep.subr.mxu0 0.0
          %534 = vmatpush1.msra.mxu0 0.0
          %535 = vmatprep.subr.mxu0 0.0
          %536 = vmatpush1.msra.mxu0 0.0
          %537 = vmatprep.subr.mxu0 0.0
          %538 = vmatpush1.msra.mxu0 0.0
          %539 = vmatprep.subr.mxu0 0.0
          %540 = vmatpush1.msra.mxu0 0.0
          %541 = vmatprep.subr.mxu0 0.0
          %542 = vmatpush1.msra.mxu0 0.0
          %543 = vmatprep.subr.mxu0 0.0
          %544 = vmatpush1.msra.mxu0 0.0
          %545 = vmatprep.subr.mxu0 0.0
          %546 = vmatpush1.msra.mxu0 0.0
          %547 = vmatprep.subr.mxu0 0.0
          %548 = vmatpush1.msra.mxu0 0.0
          %549 = vmatprep.subr.mxu0 0.0
          %550 = vmatpush1.msra.mxu0 0.0
          %551 = vmatprep.subr.mxu0 0.0
          %552 = vmatpush1.msra.mxu0 0.0
          %553 = vmatprep.subr.mxu0 0.0
          %554 = vmatpush1.msra.mxu0 0.0
          %555 = vmatprep.subr.mxu0 0.0
          %556 = vmatpush1.msra.mxu0 0.0
          %557 = vmatprep.subr.mxu0 0.0
          %558 = vmatpush1.msra.mxu0 0.0
          %559 = vmatprep.subr.mxu0 0.0
          %560 = vmatpush1.msra.mxu0 0.0
          %561 = vmatprep.subr.mxu0 0.0
          %562 = vmatpush1.msra.mxu0 0.0
          %563 = vmatprep.subr.mxu0 0.0
          %564 = vmatpush1.msra.mxu0 0.0
          %565 = vmatprep.subr.mxu0 0.0
          %566 = vmatpush1.msra.mxu0 0.0
          %567 = vmatprep.mubr.f32.mxu0 0.0
          %v568 = vand.u32 %v274, 4294901760
          %v569 = vsub.f32 %v274, %v568
          %v570 = vand.u32 %v569, 4294901760
          %571 = vmatmul.mubr.f32.gmra.mrb[0].mxu0 %v570
          %v572 = vpop.f32.mrb[0].mxu0
          %v573 = vadd.f32 %v499, %v572
          %v574 = vpop.f32.mrb[0].mxu0
          %575 = vdwg.mxu0
          %576 = vmatprep.subr.mxu0 0.0
          %v577 = vand.u32 %v267, 4294901760
          %v578 = vsub.f32 %v267, %v577
          %v579 = vand.u32 %v578, 4294901760
          %580 = vmatpush1.msra.mxu0 %v579
          %581 = vmatprep.subr.mxu0 0.0
          %582 = vmatpush1.msra.mxu0 0.0
          %583 = vmatprep.subr.mxu0 0.0
          %584 = vmatpush1.msra.mxu0 0.0
          %585 = vmatprep.subr.mxu0 0.0
          %586 = vmatpush1.msra.mxu0 0.0
          %587 = vmatprep.subr.mxu0 0.0
          %588 = vmatpush1.msra.mxu0 0.0
          %589 = vmatprep.subr.mxu0 0.0
          %590 = vmatpush1.msra.mxu0 0.0
          %591 = vmatprep.subr.mxu0 0.0
          %592 = vmatpush1.msra.mxu0 0.0
          %593 = vmatprep.subr.mxu0 0.0
          %594 = vmatpush1.msra.mxu0 0.0
          %595 = vmatprep.subr.mxu0 0.0
          %596 = vmatpush1.msra.mxu0 0.0
          %597 = vmatprep.subr.mxu0 0.0
          %598 = vmatpush1.msra.mxu0 0.0
          %599 = vmatprep.subr.mxu0 0.0
          %600 = vmatpush1.msra.mxu0 0.0
          %601 = vmatprep.subr.mxu0 0.0
          %602 = vmatpush1.msra.mxu0 0.0
          %603 = vmatprep.subr.mxu0 0.0
          %604 = vmatpush1.msra.mxu0 0.0
          %605 = vmatprep.subr.mxu0 0.0
          %606 = vmatpush1.msra.mxu0 0.0
          %607 = vmatprep.subr.mxu0 0.0
          %608 = vmatpush1.msra.mxu0 0.0
          %609 = vmatprep.subr.mxu0 0.0
          %610 = vmatpush1.msra.mxu0 0.0
          %611 = vmatprep.subr.mxu0 0.0
          %612 = vmatpush1.msra.mxu0 0.0
          %613 = vmatprep.subr.mxu0 0.0
          %614 = vmatpush1.msra.mxu0 0.0
          %615 = vmatprep.subr.mxu0 0.0
          %616 = vmatpush1.msra.mxu0 0.0
          %617 = vmatprep.subr.mxu0 0.0
          %618 = vmatpush1.msra.mxu0 0.0
          %619 = vmatprep.subr.mxu0 0.0
          %620 = vmatpush1.msra.mxu0 0.0
          %621 = vmatprep.subr.mxu0 0.0
          %622 = vmatpush1.msra.mxu0 0.0
          %623 = vmatprep.subr.mxu0 0.0
          %624 = vmatpush1.msra.mxu0 0.0
          %625 = vmatprep.subr.mxu0 0.0
          %626 = vmatpush1.msra.mxu0 0.0
          %627 = vmatprep.subr.mxu0 0.0
          %628 = vmatpush1.msra.mxu0 0.0
          %629 = vmatprep.subr.mxu0 0.0
          %630 = vmatpush1.msra.mxu0 0.0
          %631 = vmatprep.subr.mxu0 0.0
          %632 = vmatpush1.msra.mxu0 0.0
          %633 = vmatprep.subr.mxu0 0.0
          %634 = vmatpush1.msra.mxu0 0.0
          %635 = vmatprep.subr.mxu0 0.0
          %636 = vmatpush1.msra.mxu0 0.0
          %637 = vmatprep.subr.mxu0 0.0
          %638 = vmatpush1.msra.mxu0 0.0
          %639 = vmatprep.subr.mxu0 0.0
          %640 = vmatpush1.msra.mxu0 0.0
          %641 = vmatprep.subr.mxu0 0.0
          %642 = vmatpush1.msra.mxu0 0.0
          %643 = vmatprep.mubr.f32.mxu0 0.0
          %v644 = vand.u32 %v274, 4294901760
          %645 = vmatmul.mubr.f32.gmra.mrb[0].mxu0 %v644
          %v646 = vpop.f32.mrb[0].mxu0
          %v647 = vadd.f32 %v573, %v646
          %v648 = vpop.f32.mrb[0].mxu0
          %649 = vdwg.mxu0
          %650 = vmatprep.subr.mxu0 0.0
          %v651 = vand.u32 %v267, 4294901760
          %652 = vmatpush1.msra.mxu0 %v651
          %653 = vmatprep.subr.mxu0 0.0
          %654 = vmatpush1.msra.mxu0 0.0
          %655 = vmatprep.subr.mxu0 0.0
          %656 = vmatpush1.msra.mxu0 0.0
          %657 = vmatprep.subr.mxu0 0.0
          %658 = vmatpush1.msra.mxu0 0.0
          %659 = vmatprep.subr.mxu0 0.0
          %660 = vmatpush1.msra.mxu0 0.0
          %661 = vmatprep.subr.mxu0 0.0
          %662 = vmatpush1.msra.mxu0 0.0
          %663 = vmatprep.subr.mxu0 0.0
          %664 = vmatpush1.msra.mxu0 0.0
          %665 = vmatprep.subr.mxu0 0.0
          %666 = vmatpush1.msra.mxu0 0.0
          %667 = vmatprep.subr.mxu0 0.0
          %668 = vmatpush1.msra.mxu0 0.0
          %669 = vmatprep.subr.mxu0 0.0
          %670 = vmatpush1.msra.mxu0 0.0
          %671 = vmatprep.subr.mxu0 0.0
          %672 = vmatpush1.msra.mxu0 0.0
          %673 = vmatprep.subr.mxu0 0.0
          %674 = vmatpush1.msra.mxu0 0.0
          %675 = vmatprep.subr.mxu0 0.0
          %676 = vmatpush1.msra.mxu0 0.0
          %677 = vmatprep.subr.mxu0 0.0
          %678 = vmatpush1.msra.mxu0 0.0
          %679 = vmatprep.subr.mxu0 0.0
          %680 = vmatpush1.msra.mxu0 0.0
          %681 = vmatprep.subr.mxu0 0.0
          %682 = vmatpush1.msra.mxu0 0.0
          %683 = vmatprep.subr.mxu0 0.0
          %684 = vmatpush1.msra.mxu0 0.0
          %685 = vmatprep.subr.mxu0 0.0
          %686 = vmatpush1.msra.mxu0 0.0
          %687 = vmatprep.subr.mxu0 0.0
          %688 = vmatpush1.msra.mxu0 0.0
          %689 = vmatprep.subr.mxu0 0.0
          %690 = vmatpush1.msra.mxu0 0.0
          %691 = vmatprep.subr.mxu0 0.0
          %692 = vmatpush1.msra.mxu0 0.0
          %693 = vmatprep.subr.mxu0 0.0
          %694 = vmatpush1.msra.mxu0 0.0
          %695 = vmatprep.subr.mxu0 0.0
          %696 = vmatpush1.msra.mxu0 0.0
          %697 = vmatprep.subr.mxu0 0.0
          %698 = vmatpush1.msra.mxu0 0.0
          %699 = vmatprep.subr.mxu0 0.0
          %700 = vmatpush1.msra.mxu0 0.0
          %701 = vmatprep.subr.mxu0 0.0
          %702 = vmatpush1.msra.mxu0 0.0
          %703 = vmatprep.subr.mxu0 0.0
          %704 = vmatpush1.msra.mxu0 0.0
          %705 = vmatprep.subr.mxu0 0.0
          %706 = vmatpush1.msra.mxu0 0.0
          %707 = vmatprep.subr.mxu0 0.0
          %708 = vmatpush1.msra.mxu0 0.0
          %709 = vmatprep.subr.mxu0 0.0
          %710 = vmatpush1.msra.mxu0 0.0
          %711 = vmatprep.subr.mxu0 0.0
          %712 = vmatpush1.msra.mxu0 0.0
          %713 = vmatprep.subr.mxu0 0.0
          %714 = vmatpush1.msra.mxu0 0.0
          %715 = vmatprep.mubr.f32.mxu0 0.0
          %v716 = vand.u32 %v274, 4294901760
          %717 = vmatmul.mubr.f32.gmra.mrb[0].mxu0 %v716
          %v718 = vpop.f32.mrb[0].mxu0
          %v719 = vadd.f32 %v647, %v718
          %v720 = vpop.f32.mrb[0].mxu0
          %721 = vdwg.mxu0
          %vm722 = vcmask 130048
          %723 = vst.msk [vmem:[#allocation2 + $0x1] sm:$0xff] %vm722, %v719
          %s724 = scalar_lea.vmem [#allocation2], 16
          %725 = vst.msk [vmem:[%s724] sm:$0x1] %vm268, 0.0
          %726 = vst.msk [vmem:[%s724 + $0x9] sm:$0x1] %vm268, 0.0
          %s727 = scalar_lea.vmem %s254, 8
          %v728 = vld [vmem:[%s727] sm:$0xff]
          %v730 = vsel %vm272, %v728, 0
          %732 = vmatprep.subr.mxu0 0.0
          %v733 = vand.u32 %v267, 4294901760
          %734 = vmatpush1.msra.mxu0 %v733
          %735 = vmatprep.subr.mxu0 0.0
          %736 = vmatpush1.msra.mxu0 0.0
          %737 = vmatprep.subr.mxu0 0.0
          %738 = vmatpush1.msra.mxu0 0.0
          %739 = vmatprep.subr.mxu0 0.0
          %740 = vmatpush1.msra.mxu0 0.0
          %741 = vmatprep.subr.mxu0 0.0
          %742 = vmatpush1.msra.mxu0 0.0
          %743 = vmatprep.subr.mxu0 0.0
          %744 = vmatpush1.msra.mxu0 0.0
          %745 = vmatprep.subr.mxu0 0.0
          %746 = vmatpush1.msra.mxu0 0.0
          %747 = vmatprep.subr.mxu0 0.0
          %748 = vmatpush1.msra.mxu0 0.0
          %749 = vmatprep.subr.mxu0 0.0
          %750 = vmatpush1.msra.mxu0 0.0
          %751 = vmatprep.subr.mxu0 0.0
          %752 = vmatpush1.msra.mxu0 0.0
          %753 = vmatprep.subr.mxu0 0.0
          %754 = vmatpush1.msra.mxu0 0.0
          %755 = vmatprep.subr.mxu0 0.0
          %756 = vmatpush1.msra.mxu0 0.0
          %757 = vmatprep.subr.mxu0 0.0
          %758 = vmatpush1.msra.mxu0 0.0
          %759 = vmatprep.subr.mxu0 0.0
          %760 = vmatpush1.msra.mxu0 0.0
          %761 = vmatprep.subr.mxu0 0.0
          %762 = vmatpush1.msra.mxu0 0.0
          %763 = vmatprep.subr.mxu0 0.0
          %764 = vmatpush1.msra.mxu0 0.0
          %765 = vmatprep.subr.mxu0 0.0
          %766 = vmatpush1.msra.mxu0 0.0
          %767 = vmatprep.subr.mxu0 0.0
          %768 = vmatpush1.msra.mxu0 0.0
          %769 = vmatprep.subr.mxu0 0.0
          %770 = vmatpush1.msra.mxu0 0.0
          %771 = vmatprep.subr.mxu0 0.0
          %772 = vmatpush1.msra.mxu0 0.0
          %773 = vmatprep.subr.mxu0 0.0
          %774 = vmatpush1.msra.mxu0 0.0
          %775 = vmatprep.subr.mxu0 0.0
          %776 = vmatpush1.msra.mxu0 0.0
          %777 = vmatprep.subr.mxu0 0.0
          %778 = vmatpush1.msra.mxu0 0.0
          %779 = vmatprep.subr.mxu0 0.0
          %780 = vmatpush1.msra.mxu0 0.0
          %781 = vmatprep.subr.mxu0 0.0
          %782 = vmatpush1.msra.mxu0 0.0
          %783 = vmatprep.subr.mxu0 0.0
          %784 = vmatpush1.msra.mxu0 0.0
          %785 = vmatprep.subr.mxu0 0.0
          %786 = vmatpush1.msra.mxu0 0.0
          %787 = vmatprep.subr.mxu0 0.0
          %788 = vmatpush1.msra.mxu0 0.0
          %789 = vmatprep.subr.mxu0 0.0
          %790 = vmatpush1.msra.mxu0 0.0
          %791 = vmatprep.subr.mxu0 0.0
          %792 = vmatpush1.msra.mxu0 0.0
          %793 = vmatprep.subr.mxu0 0.0
          %794 = vmatpush1.msra.mxu0 0.0
          %795 = vmatprep.subr.mxu0 0.0
          %796 = vmatpush1.msra.mxu0 0.0
          %797 = vmatprep.mubr.f32.mxu0 0.0
          %v798 = vand.u32 %v730, 4294901760
          %v799 = vsub.f32 %v730, %v798
          %v800 = vand.u32 %v799, 4294901760
          %v801 = vsub.f32 %v799, %v800
          %v802 = vand.u32 %v801, 4294901760
          %803 = vmatmul.mubr.f32.gmra.mrb[0].mxu0 %v802
          %v804 = vpop.f32.mrb[0].mxu0
          %v805 = vadd.f32 0.0, %v804
          %v806 = vpop.f32.mrb[0].mxu0
          %807 = vdwg.mxu0
          %808 = vmatprep.subr.mxu0 0.0
          %v809 = vand.u32 %v267, 4294901760
          %v810 = vsub.f32 %v267, %v809
          %v811 = vand.u32 %v810, 4294901760
          %v812 = vsub.f32 %v810, %v811
          %v813 = vand.u32 %v812, 4294901760
          %814 = vmatpush1.msra.mxu0 %v813
          %815 = vmatprep.subr.mxu0 0.0
          %816 = vmatpush1.msra.mxu0 0.0
          %817 = vmatprep.subr.mxu0 0.0
          %818 = vmatpush1.msra.mxu0 0.0
          %819 = vmatprep.subr.mxu0 0.0
          %820 = vmatpush1.msra.mxu0 0.0
          %821 = vmatprep.subr.mxu0 0.0
          %822 = vmatpush1.msra.mxu0 0.0
          %823 = vmatprep.subr.mxu0 0.0
          %824 = vmatpush1.msra.mxu0 0.0
          %825 = vmatprep.subr.mxu0 0.0
          %826 = vmatpush1.msra.mxu0 0.0
          %827 = vmatprep.subr.mxu0 0.0
          %828 = vmatpush1.msra.mxu0 0.0
          %829 = vmatprep.subr.mxu0 0.0
          %830 = vmatpush1.msra.mxu0 0.0
          %831 = vmatprep.subr.mxu0 0.0
          %832 = vmatpush1.msra.mxu0 0.0
          %833 = vmatprep.subr.mxu0 0.0
          %834 = vmatpush1.msra.mxu0 0.0
          %835 = vmatprep.subr.mxu0 0.0
          %836 = vmatpush1.msra.mxu0 0.0
          %837 = vmatprep.subr.mxu0 0.0
          %838 = vmatpush1.msra.mxu0 0.0
          %839 = vmatprep.subr.mxu0 0.0
          %840 = vmatpush1.msra.mxu0 0.0
          %841 = vmatprep.subr.mxu0 0.0
          %842 = vmatpush1.msra.mxu0 0.0
          %843 = vmatprep.subr.mxu0 0.0
          %844 = vmatpush1.msra.mxu0 0.0
          %845 = vmatprep.subr.mxu0 0.0
          %846 = vmatpush1.msra.mxu0 0.0
          %847 = vmatprep.subr.mxu0 0.0
          %848 = vmatpush1.msra.mxu0 0.0
          %849 = vmatprep.subr.mxu0 0.0
          %850 = vmatpush1.msra.mxu0 0.0
          %851 = vmatprep.subr.mxu0 0.0
          %852 = vmatpush1.msra.mxu0 0.0
          %853 = vmatprep.subr.mxu0 0.0
          %854 = vmatpush1.msra.mxu0 0.0
          %855 = vmatprep.subr.mxu0 0.0
          %856 = vmatpush1.msra.mxu0 0.0
          %857 = vmatprep.subr.mxu0 0.0
          %858 = vmatpush1.msra.mxu0 0.0
          %859 = vmatprep.subr.mxu0 0.0
          %860 = vmatpush1.msra.mxu0 0.0
          %861 = vmatprep.subr.mxu0 0.0
          %862 = vmatpush1.msra.mxu0 0.0
          %863 = vmatprep.subr.mxu0 0.0
          %864 = vmatpush1.msra.mxu0 0.0
          %865 = vmatprep.subr.mxu0 0.0
          %866 = vmatpush1.msra.mxu0 0.0
          %867 = vmatprep.subr.mxu0 0.0
          %868 = vmatpush1.msra.mxu0 0.0
          %869 = vmatprep.subr.mxu0 0.0
          %870 = vmatpush1.msra.mxu0 0.0
          %871 = vmatprep.subr.mxu0 0.0
          %872 = vmatpush1.msra.mxu0 0.0
          %873 = vmatprep.subr.mxu0 0.0
          %874 = vmatpush1.msra.mxu0 0.0
          %875 = vmatprep.subr.mxu0 0.0
          %876 = vmatpush1.msra.mxu0 0.0
          %877 = vmatprep.mubr.f32.mxu0 0.0
          %v878 = vand.u32 %v730, 4294901760
          %879 = vmatmul.mubr.f32.gmra.mrb[0].mxu0 %v878
          %v880 = vpop.f32.mrb[0].mxu0
          %v881 = vadd.f32 %v805, %v880
          %v882 = vpop.f32.mrb[0].mxu0
          %883 = vdwg.mxu0
          %884 = vmatprep.subr.mxu0 0.0
          %v885 = vand.u32 %v267, 4294901760
          %v886 = vsub.f32 %v267, %v885
          %887 = vmatpush1.msra.mxu0 %v886
          %888 = vmatprep.subr.mxu0 0.0
          %889 = vmatpush1.msra.mxu0 0.0
          %890 = vmatprep.subr.mxu0 0.0
          %891 = vmatpush1.msra.mxu0 0.0
          %892 = vmatprep.subr.mxu0 0.0
          %893 = vmatpush1.msra.mxu0 0.0
          %894 = vmatprep.subr.mxu0 0.0
          %895 = vmatpush1.msra.mxu0 0.0
          %896 = vmatprep.subr.mxu0 0.0
          %897 = vmatpush1.msra.mxu0 0.0
          %898 = vmatprep.subr.mxu0 0.0
          %899 = vmatpush1.msra.mxu0 0.0
          %900 = vmatprep.subr.mxu0 0.0
          %901 = vmatpush1.msra.mxu0 0.0
          %902 = vmatprep.subr.mxu0 0.0
          %903 = vmatpush1.msra.mxu0 0.0
          %904 = vmatprep.subr.mxu0 0.0
          %905 = vmatpush1.msra.mxu0 0.0
          %906 = vmatprep.subr.mxu0 0.0
          %907 = vmatpush1.msra.mxu0 0.0
          %908 = vmatprep.subr.mxu0 0.0
          %909 = vmatpush1.msra.mxu0 0.0
          %910 = vmatprep.subr.mxu0 0.0
          %911 = vmatpush1.msra.mxu0 0.0
          %912 = vmatprep.subr.mxu0 0.0
          %913 = vmatpush1.msra.mxu0 0.0
          %914 = vmatprep.subr.mxu0 0.0
          %915 = vmatpush1.msra.mxu0 0.0
          %916 = vmatprep.subr.mxu0 0.0
          %917 = vmatpush1.msra.mxu0 0.0
          %918 = vmatprep.subr.mxu0 0.0
          %919 = vmatpush1.msra.mxu0 0.0
          %920 = vmatprep.subr.mxu0 0.0
          %921 = vmatpush1.msra.mxu0 0.0
          %922 = vmatprep.subr.mxu0 0.0
          %923 = vmatpush1.msra.mxu0 0.0
          %924 = vmatprep.subr.mxu0 0.0
          %925 = vmatpush1.msra.mxu0 0.0
          %926 = vmatprep.subr.mxu0 0.0
          %927 = vmatpush1.msra.mxu0 0.0
          %928 = vmatprep.subr.mxu0 0.0
          %929 = vmatpush1.msra.mxu0 0.0
          %930 = vmatprep.subr.mxu0 0.0
          %931 = vmatpush1.msra.mxu0 0.0
          %932 = vmatprep.subr.mxu0 0.0
          %933 = vmatpush1.msra.mxu0 0.0
          %934 = vmatprep.subr.mxu0 0.0
          %935 = vmatpush1.msra.mxu0 0.0
          %936 = vmatprep.subr.mxu0 0.0
          %937 = vmatpush1.msra.mxu0 0.0
          %938 = vmatprep.subr.mxu0 0.0
          %939 = vmatpush1.msra.mxu0 0.0
          %940 = vmatprep.subr.mxu0 0.0
          %941 = vmatpush1.msra.mxu0 0.0
          %942 = vmatprep.subr.mxu0 0.0
          %943 = vmatpush1.msra.mxu0 0.0
          %944 = vmatprep.subr.mxu0 0.0
          %945 = vmatpush1.msra.mxu0 0.0
          %946 = vmatprep.subr.mxu0 0.0
          %947 = vmatpush1.msra.mxu0 0.0
          %948 = vmatprep.subr.mxu0 0.0
          %949 = vmatpush1.msra.mxu0 0.0
          %950 = vmatprep.mubr.f32.mxu0 0.0
          %v951 = vand.u32 %v730, 4294901760
          %v952 = vsub.f32 %v730, %v951
          %953 = vmatmul.mubr.f32.gmra.mrb[0].mxu0 %v952
          %v954 = vpop.f32.mrb[0].mxu0
          %v955 = vadd.f32 %v881, %v954
          %v956 = vpop.f32.mrb[0].mxu0
          %957 = vdwg.mxu0
          %958 = vmatprep.subr.mxu0 0.0
          %v959 = vand.u32 %v267, 4294901760
          %960 = vmatpush1.msra.mxu0 %v959
          %961 = vmatprep.subr.mxu0 0.0
          %962 = vmatpush1.msra.mxu0 0.0
          %963 = vmatprep.subr.mxu0 0.0
          %964 = vmatpush1.msra.mxu0 0.0
          %965 = vmatprep.subr.mxu0 0.0
          %966 = vmatpush1.msra.mxu0 0.0
          %967 = vmatprep.subr.mxu0 0.0
          %968 = vmatpush1.msra.mxu0 0.0
          %969 = vmatprep.subr.mxu0 0.0
          %970 = vmatpush1.msra.mxu0 0.0
          %971 = vmatprep.subr.mxu0 0.0
          %972 = vmatpush1.msra.mxu0 0.0
          %973 = vmatprep.subr.mxu0 0.0
          %974 = vmatpush1.msra.mxu0 0.0
          %975 = vmatprep.subr.mxu0 0.0
          %976 = vmatpush1.msra.mxu0 0.0
          %977 = vmatprep.subr.mxu0 0.0
          %978 = vmatpush1.msra.mxu0 0.0
          %979 = vmatprep.subr.mxu0 0.0
          %980 = vmatpush1.msra.mxu0 0.0
          %981 = vmatprep.subr.mxu0 0.0
          %982 = vmatpush1.msra.mxu0 0.0
          %983 = vmatprep.subr.mxu0 0.0
          %984 = vmatpush1.msra.mxu0 0.0
          %985 = vmatprep.subr.mxu0 0.0
          %986 = vmatpush1.msra.mxu0 0.0
          %987 = vmatprep.subr.mxu0 0.0
          %988 = vmatpush1.msra.mxu0 0.0
          %989 = vmatprep.subr.mxu0 0.0
          %990 = vmatpush1.msra.mxu0 0.0
          %991 = vmatprep.subr.mxu0 0.0
          %992 = vmatpush1.msra.mxu0 0.0
          %993 = vmatprep.subr.mxu0 0.0
          %994 = vmatpush1.msra.mxu0 0.0
          %995 = vmatprep.subr.mxu0 0.0
          %996 = vmatpush1.msra.mxu0 0.0
          %997 = vmatprep.subr.mxu0 0.0
          %998 = vmatpush1.msra.mxu0 0.0
          %999 = vmatprep.subr.mxu0 0.0
          %1000 = vmatpush1.msra.mxu0 0.0
          %1001 = vmatprep.subr.mxu0 0.0
          %1002 = vmatpush1.msra.mxu0 0.0
          %1003 = vmatprep.subr.mxu0 0.0
          %1004 = vmatpush1.msra.mxu0 0.0
          %1005 = vmatprep.subr.mxu0 0.0
          %1006 = vmatpush1.msra.mxu0 0.0
          %1007 = vmatprep.subr.mxu0 0.0
          %1008 = vmatpush1.msra.mxu0 0.0
          %1009 = vmatprep.subr.mxu0 0.0
          %1010 = vmatpush1.msra.mxu0 0.0
          %1011 = vmatprep.subr.mxu0 0.0
          %1012 = vmatpush1.msra.mxu0 0.0
          %1013 = vmatprep.subr.mxu0 0.0
          %1014 = vmatpush1.msra.mxu0 0.0
          %1015 = vmatprep.subr.mxu0 0.0
          %1016 = vmatpush1.msra.mxu0 0.0
          %1017 = vmatprep.subr.mxu0 0.0
          %1018 = vmatpush1.msra.mxu0 0.0
          %1019 = vmatprep.subr.mxu0 0.0
          %1020 = vmatpush1.msra.mxu0 0.0
          %1021 = vmatprep.subr.mxu0 0.0
          %1022 = vmatpush1.msra.mxu0 0.0
          %1023 = vmatprep.mubr.f32.mxu0 0.0
          %v1024 = vand.u32 %v730, 4294901760
          %v1025 = vsub.f32 %v730, %v1024
          %v1026 = vand.u32 %v1025, 4294901760
          %1027 = vmatmul.mubr.f32.gmra.mrb[0].mxu0 %v1026
          %v1028 = vpop.f32.mrb[0].mxu0
          %v1029 = vadd.f32 %v955, %v1028
          %v1030 = vpop.f32.mrb[0].mxu0
          %1031 = vdwg.mxu0
          %1032 = vmatprep.subr.mxu0 0.0
          %v1033 = vand.u32 %v267, 4294901760
          %v1034 = vsub.f32 %v267, %v1033
          %v1035 = vand.u32 %v1034, 4294901760
          %1036 = vmatpush1.msra.mxu0 %v1035
          %1037 = vmatprep.subr.mxu0 0.0
          %1038 = vmatpush1.msra.mxu0 0.0
          %1039 = vmatprep.subr.mxu0 0.0
          %1040 = vmatpush1.msra.mxu0 0.0
          %1041 = vmatprep.subr.mxu0 0.0
          %1042 = vmatpush1.msra.mxu0 0.0
          %1043 = vmatprep.subr.mxu0 0.0
          %1044 = vmatpush1.msra.mxu0 0.0
          %1045 = vmatprep.subr.mxu0 0.0
          %1046 = vmatpush1.msra.mxu0 0.0
          %1047 = vmatprep.subr.mxu0 0.0
          %1048 = vmatpush1.msra.mxu0 0.0
          %1049 = vmatprep.subr.mxu0 0.0
          %1050 = vmatpush1.msra.mxu0 0.0
          %1051 = vmatprep.subr.mxu0 0.0
          %1052 = vmatpush1.msra.mxu0 0.0
          %1053 = vmatprep.subr.mxu0 0.0
          %1054 = vmatpush1.msra.mxu0 0.0
          %1055 = vmatprep.subr.mxu0 0.0
          %1056 = vmatpush1.msra.mxu0 0.0
          %1057 = vmatprep.subr.mxu0 0.0
          %1058 = vmatpush1.msra.mxu0 0.0
          %1059 = vmatprep.subr.mxu0 0.0
          %1060 = vmatpush1.msra.mxu0 0.0
          %1061 = vmatprep.subr.mxu0 0.0
          %1062 = vmatpush1.msra.mxu0 0.0
          %1063 = vmatprep.subr.mxu0 0.0
          %1064 = vmatpush1.msra.mxu0 0.0
          %1065 = vmatprep.subr.mxu0 0.0
          %1066 = vmatpush1.msra.mxu0 0.0
          %1067 = vmatprep.subr.mxu0 0.0
          %1068 = vmatpush1.msra.mxu0 0.0
          %1069 = vmatprep.subr.mxu0 0.0
          %1070 = vmatpush1.msra.mxu0 0.0
          %1071 = vmatprep.subr.mxu0 0.0
          %1072 = vmatpush1.msra.mxu0 0.0
          %1073 = vmatprep.subr.mxu0 0.0
          %1074 = vmatpush1.msra.mxu0 0.0
          %1075 = vmatprep.subr.mxu0 0.0
          %1076 = vmatpush1.msra.mxu0 0.0
          %1077 = vmatprep.subr.mxu0 0.0
          %1078 = vmatpush1.msra.mxu0 0.0
          %1079 = vmatprep.subr.mxu0 0.0
          %1080 = vmatpush1.msra.mxu0 0.0
          %1081 = vmatprep.subr.mxu0 0.0
          %1082 = vmatpush1.msra.mxu0 0.0
          %1083 = vmatprep.subr.mxu0 0.0
          %1084 = vmatpush1.msra.mxu0 0.0
          %1085 = vmatprep.subr.mxu0 0.0
          %1086 = vmatpush1.msra.mxu0 0.0
          %1087 = vmatprep.subr.mxu0 0.0
          %1088 = vmatpush1.msra.mxu0 0.0
          %1089 = vmatprep.subr.mxu0 0.0
          %1090 = vmatpush1.msra.mxu0 0.0
          %1091 = vmatprep.subr.mxu0 0.0
          %1092 = vmatpush1.msra.mxu0 0.0
          %1093 = vmatprep.subr.mxu0 0.0
          %1094 = vmatpush1.msra.mxu0 0.0
          %1095 = vmatprep.subr.mxu0 0.0
          %1096 = vmatpush1.msra.mxu0 0.0
          %1097 = vmatprep.subr.mxu0 0.0
          %1098 = vmatpush1.msra.mxu0 0.0
          %1099 = vmatprep.mubr.f32.mxu0 0.0
          %v1100 = vand.u32 %v730, 4294901760
          %1101 = vmatmul.mubr.f32.gmra.mrb[0].mxu0 %v1100
          %v1102 = vpop.f32.mrb[0].mxu0
          %v1103 = vadd.f32 %v1029, %v1102
          %v1104 = vpop.f32.mrb[0].mxu0
          %1105 = vdwg.mxu0
          %1106 = vmatprep.subr.mxu0 0.0
          %v1107 = vand.u32 %v267, 4294901760
          %1108 = vmatpush1.msra.mxu0 %v1107
          %1109 = vmatprep.subr.mxu0 0.0
          %1110 = vmatpush1.msra.mxu0 0.0
          %1111 = vmatprep.subr.mxu0 0.0
          %1112 = vmatpush1.msra.mxu0 0.0
          %1113 = vmatprep.subr.mxu0 0.0
          %1114 = vmatpush1.msra.mxu0 0.0
          %1115 = vmatprep.subr.mxu0 0.0
          %1116 = vmatpush1.msra.mxu0 0.0
          %1117 = vmatprep.subr.mxu0 0.0
          %1118 = vmatpush1.msra.mxu0 0.0
          %1119 = vmatprep.subr.mxu0 0.0
          %1120 = vmatpush1.msra.mxu0 0.0
          %1121 = vmatprep.subr.mxu0 0.0
          %1122 = vmatpush1.msra.mxu0 0.0
          %1123 = vmatprep.subr.mxu0 0.0
          %1124 = vmatpush1.msra.mxu0 0.0
          %1125 = vmatprep.subr.mxu0 0.0
          %1126 = vmatpush1.msra.mxu0 0.0
          %1127 = vmatprep.subr.mxu0 0.0
          %1128 = vmatpush1.msra.mxu0 0.0
          %1129 = vmatprep.subr.mxu0 0.0
          %1130 = vmatpush1.msra.mxu0 0.0
          %1131 = vmatprep.subr.mxu0 0.0
          %1132 = vmatpush1.msra.mxu0 0.0
          %1133 = vmatprep.subr.mxu0 0.0
          %1134 = vmatpush1.msra.mxu0 0.0
          %1135 = vmatprep.subr.mxu0 0.0
          %1136 = vmatpush1.msra.mxu0 0.0
          %1137 = vmatprep.subr.mxu0 0.0
          %1138 = vmatpush1.msra.mxu0 0.0
          %1139 = vmatprep.subr.mxu0 0.0
          %1140 = vmatpush1.msra.mxu0 0.0
          %1141 = vmatprep.subr.mxu0 0.0
          %1142 = vmatpush1.msra.mxu0 0.0
          %1143 = vmatprep.subr.mxu0 0.0
          %1144 = vmatpush1.msra.mxu0 0.0
          %1145 = vmatprep.subr.mxu0 0.0
          %1146 = vmatpush1.msra.mxu0 0.0
          %1147 = vmatprep.subr.mxu0 0.0
          %1148 = vmatpush1.msra.mxu0 0.0
          %1149 = vmatprep.subr.mxu0 0.0
          %1150 = vmatpush1.msra.mxu0 0.0
          %1151 = vmatprep.subr.mxu0 0.0
          %1152 = vmatpush1.msra.mxu0 0.0
          %1153 = vmatprep.subr.mxu0 0.0
          %1154 = vmatpush1.msra.mxu0 0.0
          %1155 = vmatprep.subr.mxu0 0.0
          %1156 = vmatpush1.msra.mxu0 0.0
          %1157 = vmatprep.subr.mxu0 0.0
          %1158 = vmatpush1.msra.mxu0 0.0
          %1159 = vmatprep.subr.mxu0 0.0
          %1160 = vmatpush1.msra.mxu0 0.0
          %1161 = vmatprep.subr.mxu0 0.0
          %1162 = vmatpush1.msra.mxu0 0.0
          %1163 = vmatprep.subr.mxu0 0.0
          %1164 = vmatpush1.msra.mxu0 0.0
          %1165 = vmatprep.subr.mxu0 0.0
          %1166 = vmatpush1.msra.mxu0 0.0
          %1167 = vmatprep.subr.mxu0 0.0
          %1168 = vmatpush1.msra.mxu0 0.0
          %1169 = vmatprep.subr.mxu0 0.0
          %1170 = vmatpush1.msra.mxu0 0.0
          %1171 = vmatprep.mubr.f32.mxu0 0.0
          %v1172 = vand.u32 %v730, 4294901760
          %1173 = vmatmul.mubr.f32.gmra.mrb[0].mxu0 %v1172
          %v1174 = vpop.f32.mrb[0].mxu0
          %v1175 = vadd.f32 %v1103, %v1174
          %v1176 = vpop.f32.mrb[0].mxu0
          %1177 = vdwg.mxu0
          %1178 = vst.msk [vmem:[%s724 + $0x1] sm:$0xff] %vm722, %v1175
          %s1179 = scalar_lea.vmem [#allocation2], 32
          %1180 = vst.msk [vmem:[%s1179] sm:$0x1] %vm268, 0.0
          %1181 = vst.msk [vmem:[%s1179 + $0x9] sm:$0x1] %vm268, 0.0
          %s1182 = scalar_lea.vmem %s254, 16
          %v1183 = vld [vmem:[%s1182] sm:$0xff]
          %v1185 = vsel %vm272, %v1183, 0
          %1187 = vmatprep.subr.mxu0 0.0
          %v1188 = vand.u32 %v267, 4294901760
          %1189 = vmatpush1.msra.mxu0 %v1188
          %1190 = vmatprep.subr.mxu0 0.0
          %1191 = vmatpush1.msra.mxu0 0.0
          %1192 = vmatprep.subr.mxu0 0.0
          %1193 = vmatpush1.msra.mxu0 0.0
          %1194 = vmatprep.subr.mxu0 0.0
          %1195 = vmatpush1.msra.mxu0 0.0
          %1196 = vmatprep.subr.mxu0 0.0
          %1197 = vmatpush1.msra.mxu0 0.0
          %1198 = vmatprep.subr.mxu0 0.0
          %1199 = vmatpush1.msra.mxu0 0.0
          %1200 = vmatprep.subr.mxu0 0.0
          %1201 = vmatpush1.msra.mxu0 0.0
          %1202 = vmatprep.subr.mxu0 0.0
          %1203 = vmatpush1.msra.mxu0 0.0
          %1204 = vmatprep.subr.mxu0 0.0
          %1205 = vmatpush1.msra.mxu0 0.0
          %1206 = vmatprep.subr.mxu0 0.0
          %1207 = vmatpush1.msra.mxu0 0.0
          %1208 = vmatprep.subr.mxu0 0.0
          %1209 = vmatpush1.msra.mxu0 0.0
          %1210 = vmatprep.subr.mxu0 0.0
          %1211 = vmatpush1.msra.mxu0 0.0
          %1212 = vmatprep.subr.mxu0 0.0
          %1213 = vmatpush1.msra.mxu0 0.0
          %1214 = vmatprep.subr.mxu0 0.0
          %1215 = vmatpush1.msra.mxu0 0.0
          %1216 = vmatprep.subr.mxu0 0.0
          %1217 = vmatpush1.msra.mxu0 0.0
          %1218 = vmatprep.subr.mxu0 0.0
          %1219 = vmatpush1.msra.mxu0 0.0
          %1220 = vmatprep.subr.mxu0 0.0
          %1221 = vmatpush1.msra.mxu0 0.0
          %1222 = vmatprep.subr.mxu0 0.0
          %1223 = vmatpush1.msra.mxu0 0.0
          %1224 = vmatprep.subr.mxu0 0.0
          %1225 = vmatpush1.msra.mxu0 0.0
          %1226 = vmatprep.subr.mxu0 0.0
          %1227 = vmatpush1.msra.mxu0 0.0
          %1228 = vmatprep.subr.mxu0 0.0
          %1229 = vmatpush1.msra.mxu0 0.0
          %1230 = vmatprep.subr.mxu0 0.0
          %1231 = vmatpush1.msra.mxu0 0.0
          %1232 = vmatprep.subr.mxu0 0.0
          %1233 = vmatpush1.msra.mxu0 0.0
          %1234 = vmatprep.subr.mxu0 0.0
          %1235 = vmatpush1.msra.mxu0 0.0
          %1236 = vmatprep.subr.mxu0 0.0
          %1237 = vmatpush1.msra.mxu0 0.0
          %1238 = vmatprep.subr.mxu0 0.0
          %1239 = vmatpush1.msra.mxu0 0.0
          %1240 = vmatprep.subr.mxu0 0.0
          %1241 = vmatpush1.msra.mxu0 0.0
          %1242 = vmatprep.subr.mxu0 0.0
          %1243 = vmatpush1.msra.mxu0 0.0
          %1244 = vmatprep.subr.mxu0 0.0
          %1245 = vmatpush1.msra.mxu0 0.0
          %1246 = vmatprep.subr.mxu0 0.0
          %1247 = vmatpush1.msra.mxu0 0.0
          %1248 = vmatprep.subr.mxu0 0.0
          %1249 = vmatpush1.msra.mxu0 0.0
          %1250 = vmatprep.subr.mxu0 0.0
          %1251 = vmatpush1.msra.mxu0 0.0
          %1252 = vmatprep.mubr.f32.mxu0 0.0
          %v1253 = vand.u32 %v1185, 4294901760
          %v1254 = vsub.f32 %v1185, %v1253
          %v1255 = vand.u32 %v1254, 4294901760
          %v1256 = vsub.f32 %v1254, %v1255
          %v1257 = vand.u32 %v1256, 4294901760
          %1258 = vmatmul.mubr.f32.gmra.mrb[0].mxu0 %v1257
          %v1259 = vpop.f32.mrb[0].mxu0
          %v1260 = vadd.f32 0.0, %v1259
          %v1261 = vpop.f32.mrb[0].mxu0
          %1262 = vdwg.mxu0
          %1263 = vmatprep.subr.mxu0 0.0
          %v1264 = vand.u32 %v267, 4294901760
          %v1265 = vsub.f32 %v267, %v1264
          %v1266 = vand.u32 %v1265, 4294901760
          %v1267 = vsub.f32 %v1265, %v1266
          %v1268 = vand.u32 %v1267, 4294901760
          %1269 = vmatpush1.msra.mxu0 %v1268
          %1270 = vmatprep.subr.mxu0 0.0
          %1271 = vmatpush1.msra.mxu0 0.0
          %1272 = vmatprep.subr.mxu0 0.0
          %1273 = vmatpush1.msra.mxu0 0.0
          %1274 = vmatprep.subr.mxu0 0.0
          %1275 = vmatpush1.msra.mxu0 0.0
          %1276 = vmatprep.subr.mxu0 0.0
          %1277 = vmatpush1.msra.mxu0 0.0
          %1278 = vmatprep.subr.mxu0 0.0
          %1279 = vmatpush1.msra.mxu0 0.0
          %1280 = vmatprep.subr.mxu0 0.0
          %1281 = vmatpush1.msra.mxu0 0.0
          %1282 = vmatprep.subr.mxu0 0.0
          %1283 = vmatpush1.msra.mxu0 0.0
          %1284 = vmatprep.subr.mxu0 0.0
          %1285 = vmatpush1.msra.mxu0 0.0
          %1286 = vmatprep.subr.mxu0 0.0
          %1287 = vmatpush1.msra.mxu0 0.0
          %1288 = vmatprep.subr.mxu0 0.0
          %1289 = vmatpush1.msra.mxu0 0.0
          %1290 = vmatprep.subr.mxu0 0.0
          %1291 = vmatpush1.msra.mxu0 0.0
          %1292 = vmatprep.subr.mxu0 0.0
          %1293 = vmatpush1.msra.mxu0 0.0
          %1294 = vmatprep.subr.mxu0 0.0
          %1295 = vmatpush1.msra.mxu0 0.0
          %1296 = vmatprep.subr.mxu0 0.0
          %1297 = vmatpush1.msra.mxu0 0.0
          %1298 = vmatprep.subr.mxu0 0.0
          %1299 = vmatpush1.msra.mxu0 0.0
          %1300 = vmatprep.subr.mxu0 0.0
          %1301 = vmatpush1.msra.mxu0 0.0
          %1302 = vmatprep.subr.mxu0 0.0
          %1303 = vmatpush1.msra.mxu0 0.0
          %1304 = vmatprep.subr.mxu0 0.0
          %1305 = vmatpush1.msra.mxu0 0.0
          %1306 = vmatprep.subr.mxu0 0.0
          %1307 = vmatpush1.msra.mxu0 0.0
          %1308 = vmatprep.subr.mxu0 0.0
          %1309 = vmatpush1.msra.mxu0 0.0
          %1310 = vmatprep.subr.mxu0 0.0
          %1311 = vmatpush1.msra.mxu0 0.0
          %1312 = vmatprep.subr.mxu0 0.0
          %1313 = vmatpush1.msra.mxu0 0.0
          %1314 = vmatprep.subr.mxu0 0.0
          %1315 = vmatpush1.msra.mxu0 0.0
          %1316 = vmatprep.subr.mxu0 0.0
          %1317 = vmatpush1.msra.mxu0 0.0
          %1318 = vmatprep.subr.mxu0 0.0
          %1319 = vmatpush1.msra.mxu0 0.0
          %1320 = vmatprep.subr.mxu0 0.0
          %1321 = vmatpush1.msra.mxu0 0.0
          %1322 = vmatprep.subr.mxu0 0.0
          %1323 = vmatpush1.msra.mxu0 0.0
          %1324 = vmatprep.subr.mxu0 0.0
          %1325 = vmatpush1.msra.mxu0 0.0
          %1326 = vmatprep.subr.mxu0 0.0
          %1327 = vmatpush1.msra.mxu0 0.0
          %1328 = vmatprep.subr.mxu0 0.0
          %1329 = vmatpush1.msra.mxu0 0.0
          %1330 = vmatprep.subr.mxu0 0.0
          %1331 = vmatpush1.msra.mxu0 0.0
          %1332 = vmatprep.mubr.f32.mxu0 0.0
          %v1333 = vand.u32 %v1185, 4294901760
          %1334 = vmatmul.mubr.f32.gmra.mrb[0].mxu0 %v1333
          %v1335 = vpop.f32.mrb[0].mxu0
          %v1336 = vadd.f32 %v1260, %v1335
          %v1337 = vpop.f32.mrb[0].mxu0
          %1338 = vdwg.mxu0
          %1339 = vmatprep.subr.mxu0 0.0
          %v1340 = vand.u32 %v267, 4294901760
          %v1341 = vsub.f32 %v267, %v1340
          %1342 = vmatpush1.msra.mxu0 %v1341
          %1343 = vmatprep.subr.mxu0 0.0
          %1344 = vmatpush1.msra.mxu0 0.0
          %1345 = vmatprep.subr.mxu0 0.0
          %1346 = vmatpush1.msra.mxu0 0.0
          %1347 = vmatprep.subr.mxu0 0.0
          %1348 = vmatpush1.msra.mxu0 0.0
          %1349 = vmatprep.subr.mxu0 0.0
          %1350 = vmatpush1.msra.mxu0 0.0
          %1351 = vmatprep.subr.mxu0 0.0
          %1352 = vmatpush1.msra.mxu0 0.0
          %1353 = vmatprep.subr.mxu0 0.0
          %1354 = vmatpush1.msra.mxu0 0.0
          %1355 = vmatprep.subr.mxu0 0.0
          %1356 = vmatpush1.msra.mxu0 0.0
          %1357 = vmatprep.subr.mxu0 0.0
          %1358 = vmatpush1.msra.mxu0 0.0
          %1359 = vmatprep.subr.mxu0 0.0
          %1360 = vmatpush1.msra.mxu0 0.0
          %1361 = vmatprep.subr.mxu0 0.0
          %1362 = vmatpush1.msra.mxu0 0.0
          %1363 = vmatprep.subr.mxu0 0.0
          %1364 = vmatpush1.msra.mxu0 0.0
          %1365 = vmatprep.subr.mxu0 0.0
          %1366 = vmatpush1.msra.mxu0 0.0
          %1367 = vmatprep.subr.mxu0 0.0
          %1368 = vmatpush1.msra.mxu0 0.0
          %1369 = vmatprep.subr.mxu0 0.0
          %1370 = vmatpush1.msra.mxu0 0.0
          %1371 = vmatprep.subr.mxu0 0.0
          %1372 = vmatpush1.msra.mxu0 0.0
          %1373 = vmatprep.subr.mxu0 0.0
          %1374 = vmatpush1.msra.mxu0 0.0
          %1375 = vmatprep.subr.mxu0 0.0
          %1376 = vmatpush1.msra.mxu0 0.0
          %1377 = vmatprep.subr.mxu0 0.0
          %1378 = vmatpush1.msra.mxu0 0.0
          %1379 = vmatprep.subr.mxu0 0.0
          %1380 = vmatpush1.msra.mxu0 0.0
          %1381 = vmatprep.subr.mxu0 0.0
          %1382 = vmatpush1.msra.mxu0 0.0
          %1383 = vmatprep.subr.mxu0 0.0
          %1384 = vmatpush1.msra.mxu0 0.0
          %1385 = vmatprep.subr.mxu0 0.0
          %1386 = vmatpush1.msra.mxu0 0.0
          %1387 = vmatprep.subr.mxu0 0.0
          %1388 = vmatpush1.msra.mxu0 0.0
          %1389 = vmatprep.subr.mxu0 0.0
          %1390 = vmatpush1.msra.mxu0 0.0
          %1391 = vmatprep.subr.mxu0 0.0
          %1392 = vmatpush1.msra.mxu0 0.0
          %1393 = vmatprep.subr.mxu0 0.0
          %1394 = vmatpush1.msra.mxu0 0.0
          %1395 = vmatprep.subr.mxu0 0.0
          %1396 = vmatpush1.msra.mxu0 0.0
          %1397 = vmatprep.subr.mxu0 0.0
          %1398 = vmatpush1.msra.mxu0 0.0
          %1399 = vmatprep.subr.mxu0 0.0
          %1400 = vmatpush1.msra.mxu0 0.0
          %1401 = vmatprep.subr.mxu0 0.0
          %1402 = vmatpush1.msra.mxu0 0.0
          %1403 = vmatprep.subr.mxu0 0.0
          %1404 = vmatpush1.msra.mxu0 0.0
          %1405 = vmatprep.mubr.f32.mxu0 0.0
          %v1406 = vand.u32 %v1185, 4294901760
          %v1407 = vsub.f32 %v1185, %v1406
          %1408 = vmatmul.mubr.f32.gmra.mrb[0].mxu0 %v1407
          %v1409 = vpop.f32.mrb[0].mxu0
          %v1410 = vadd.f32 %v1336, %v1409
          %v1411 = vpop.f32.mrb[0].mxu0
          %1412 = vdwg.mxu0
          %1413 = vmatprep.subr.mxu0 0.0
          %v1414 = vand.u32 %v267, 4294901760
          %1415 = vmatpush1.msra.mxu0 %v1414
          %1416 = vmatprep.subr.mxu0 0.0
          %1417 = vmatpush1.msra.mxu0 0.0
          %1418 = vmatprep.subr.mxu0 0.0
          %1419 = vmatpush1.msra.mxu0 0.0
          %1420 = vmatprep.subr.mxu0 0.0
          %1421 = vmatpush1.msra.mxu0 0.0
          %1422 = vmatprep.subr.mxu0 0.0
          %1423 = vmatpush1.msra.mxu0 0.0
          %1424 = vmatprep.subr.mxu0 0.0
          %1425 = vmatpush1.msra.mxu0 0.0
          %1426 = vmatprep.subr.mxu0 0.0
          %1427 = vmatpush1.msra.mxu0 0.0
          %1428 = vmatprep.subr.mxu0 0.0
          %1429 = vmatpush1.msra.mxu0 0.0
          %1430 = vmatprep.subr.mxu0 0.0
          %1431 = vmatpush1.msra.mxu0 0.0
          %1432 = vmatprep.subr.mxu0 0.0
          %1433 = vmatpush1.msra.mxu0 0.0
          %1434 = vmatprep.subr.mxu0 0.0
          %1435 = vmatpush1.msra.mxu0 0.0
          %1436 = vmatprep.subr.mxu0 0.0
          %1437 = vmatpush1.msra.mxu0 0.0
          %1438 = vmatprep.subr.mxu0 0.0
          %1439 = vmatpush1.msra.mxu0 0.0
          %1440 = vmatprep.subr.mxu0 0.0
          %1441 = vmatpush1.msra.mxu0 0.0
          %1442 = vmatprep.subr.mxu0 0.0
          %1443 = vmatpush1.msra.mxu0 0.0
          %1444 = vmatprep.subr.mxu0 0.0
          %1445 = vmatpush1.msra.mxu0 0.0
          %1446 = vmatprep.subr.mxu0 0.0
          %1447 = vmatpush1.msra.mxu0 0.0
          %1448 = vmatprep.subr.mxu0 0.0
          %1449 = vmatpush1.msra.mxu0 0.0
          %1450 = vmatprep.subr.mxu0 0.0
          %1451 = vmatpush1.msra.mxu0 0.0
          %1452 = vmatprep.subr.mxu0 0.0
          %1453 = vmatpush1.msra.mxu0 0.0
          %1454 = vmatprep.subr.mxu0 0.0
          %1455 = vmatpush1.msra.mxu0 0.0
          %1456 = vmatprep.subr.mxu0 0.0
          %1457 = vmatpush1.msra.mxu0 0.0
          %1458 = vmatprep.subr.mxu0 0.0
          %1459 = vmatpush1.msra.mxu0 0.0
          %1460 = vmatprep.subr.mxu0 0.0
          %1461 = vmatpush1.msra.mxu0 0.0
          %1462 = vmatprep.subr.mxu0 0.0
          %1463 = vmatpush1.msra.mxu0 0.0
          %1464 = vmatprep.subr.mxu0 0.0
          %1465 = vmatpush1.msra.mxu0 0.0
          %1466 = vmatprep.subr.mxu0 0.0
          %1467 = vmatpush1.msra.mxu0 0.0
          %1468 = vmatprep.subr.mxu0 0.0
          %1469 = vmatpush1.msra.mxu0 0.0
          %1470 = vmatprep.subr.mxu0 0.0
          %1471 = vmatpush1.msra.mxu0 0.0
          %1472 = vmatprep.subr.mxu0 0.0
          %1473 = vmatpush1.msra.mxu0 0.0
          %1474 = vmatprep.subr.mxu0 0.0
          %1475 = vmatpush1.msra.mxu0 0.0
          %1476 = vmatprep.subr.mxu0 0.0
          %1477 = vmatpush1.msra.mxu0 0.0
          %1478 = vmatprep.mubr.f32.mxu0 0.0
          %v1479 = vand.u32 %v1185, 4294901760
          %v1480 = vsub.f32 %v1185, %v1479
          %v1481 = vand.u32 %v1480, 4294901760
          %1482 = vmatmul.mubr.f32.gmra.mrb[0].mxu0 %v1481
          %v1483 = vpop.f32.mrb[0].mxu0
          %v1484 = vadd.f32 %v1410, %v1483
          %v1485 = vpop.f32.mrb[0].mxu0
          %1486 = vdwg.mxu0
          %1487 = vmatprep.subr.mxu0 0.0
          %v1488 = vand.u32 %v267, 4294901760
          %v1489 = vsub.f32 %v267, %v1488
          %v1490 = vand.u32 %v1489, 4294901760
          %1491 = vmatpush1.msra.mxu0 %v1490
          %1492 = vmatprep.subr.mxu0 0.0
          %1493 = vmatpush1.msra.mxu0 0.0
          %1494 = vmatprep.subr.mxu0 0.0
          %1495 = vmatpush1.msra.mxu0 0.0
          %1496 = vmatprep.subr.mxu0 0.0
          %1497 = vmatpush1.msra.mxu0 0.0
          %1498 = vmatprep.subr.mxu0 0.0
          %1499 = vmatpush1.msra.mxu0 0.0
          %1500 = vmatprep.subr.mxu0 0.0
          %1501 = vmatpush1.msra.mxu0 0.0
          %1502 = vmatprep.subr.mxu0 0.0
          %1503 = vmatpush1.msra.mxu0 0.0
          %1504 = vmatprep.subr.mxu0 0.0
          %1505 = vmatpush1.msra.mxu0 0.0
          %1506 = vmatprep.subr.mxu0 0.0
          %1507 = vmatpush1.msra.mxu0 0.0
          %1508 = vmatprep.subr.mxu0 0.0
          %1509 = vmatpush1.msra.mxu0 0.0
          %1510 = vmatprep.subr.mxu0 0.0
          %1511 = vmatpush1.msra.mxu0 0.0
          %1512 = vmatprep.subr.mxu0 0.0
          %1513 = vmatpush1.msra.mxu0 0.0
          %1514 = vmatprep.subr.mxu0 0.0
          %1515 = vmatpush1.msra.mxu0 0.0
          %1516 = vmatprep.subr.mxu0 0.0
          %1517 = vmatpush1.msra.mxu0 0.0
          %1518 = vmatprep.subr.mxu0 0.0
          %1519 = vmatpush1.msra.mxu0 0.0
          %1520 = vmatprep.subr.mxu0 0.0
          %1521 = vmatpush1.msra.mxu0 0.0
          %1522 = vmatprep.subr.mxu0 0.0
          %1523 = vmatpush1.msra.mxu0 0.0
          %1524 = vmatprep.subr.mxu0 0.0
          %1525 = vmatpush1.msra.mxu0 0.0
          %1526 = vmatprep.subr.mxu0 0.0
          %1527 = vmatpush1.msra.mxu0 0.0
          %1528 = vmatprep.subr.mxu0 0.0
          %1529 = vmatpush1.msra.mxu0 0.0
          %1530 = vmatprep.subr.mxu0 0.0
          %1531 = vmatpush1.msra.mxu0 0.0
          %1532 = vmatprep.subr.mxu0 0.0
          %1533 = vmatpush1.msra.mxu0 0.0
          %1534 = vmatprep.subr.mxu0 0.0
          %1535 = vmatpush1.msra.mxu0 0.0
          %1536 = vmatprep.subr.mxu0 0.0
          %1537 = vmatpush1.msra.mxu0 0.0
          %1538 = vmatprep.subr.mxu0 0.0
          %1539 = vmatpush1.msra.mxu0 0.0
          %1540 = vmatprep.subr.mxu0 0.0
          %1541 = vmatpush1.msra.mxu0 0.0
          %1542 = vmatprep.subr.mxu0 0.0
          %1543 = vmatpush1.msra.mxu0 0.0
          %1544 = vmatprep.subr.mxu0 0.0
          %1545 = vmatpush1.msra.mxu0 0.0
          %1546 = vmatprep.subr.mxu0 0.0
          %1547 = vmatpush1.msra.mxu0 0.0
          %1548 = vmatprep.subr.mxu0 0.0
          %1549 = vmatpush1.msra.mxu0 0.0
          %1550 = vmatprep.subr.mxu0 0.0
          %1551 = vmatpush1.msra.mxu0 0.0
          %1552 = vmatprep.subr.mxu0 0.0
          %1553 = vmatpush1.msra.mxu0 0.0
          %1554 = vmatprep.mubr.f32.mxu0 0.0
          %v1555 = vand.u32 %v1185, 4294901760
          %1556 = vmatmul.mubr.f32.gmra.mrb[0].mxu0 %v1555
          %v1557 = vpop.f32.mrb[0].mxu0
          %v1558 = vadd.f32 %v1484, %v1557
          %v1559 = vpop.f32.mrb[0].mxu0
          %1560 = vdwg.mxu0
          %1561 = vmatprep.subr.mxu0 0.0
          %v1562 = vand.u32 %v267, 4294901760
          %1563 = vmatpush1.msra.mxu0 %v1562
          %1564 = vmatprep.subr.mxu0 0.0
          %1565 = vmatpush1.msra.mxu0 0.0
          %1566 = vmatprep.subr.mxu0 0.0
          %1567 = vmatpush1.msra.mxu0 0.0
          %1568 = vmatprep.subr.mxu0 0.0
          %1569 = vmatpush1.msra.mxu0 0.0
          %1570 = vmatprep.subr.mxu0 0.0
          %1571 = vmatpush1.msra.mxu0 0.0
          %1572 = vmatprep.subr.mxu0 0.0
          %1573 = vmatpush1.msra.mxu0 0.0
          %1574 = vmatprep.subr.mxu0 0.0
          %1575 = vmatpush1.msra.mxu0 0.0
          %1576 = vmatprep.subr.mxu0 0.0
          %1577 = vmatpush1.msra.mxu0 0.0
          %1578 = vmatprep.subr.mxu0 0.0
          %1579 = vmatpush1.msra.mxu0 0.0
          %1580 = vmatprep.subr.mxu0 0.0
          %1581 = vmatpush1.msra.mxu0 0.0
          %1582 = vmatprep.subr.mxu0 0.0
          %1583 = vmatpush1.msra.mxu0 0.0
          %1584 = vmatprep.subr.mxu0 0.0
          %1585 = vmatpush1.msra.mxu0 0.0
          %1586 = vmatprep.subr.mxu0 0.0
          %1587 = vmatpush1.msra.mxu0 0.0
          %1588 = vmatprep.subr.mxu0 0.0
          %1589 = vmatpush1.msra.mxu0 0.0
          %1590 = vmatprep.subr.mxu0 0.0
          %1591 = vmatpush1.msra.mxu0 0.0
          %1592 = vmatprep.subr.mxu0 0.0
          %1593 = vmatpush1.msra.mxu0 0.0
          %1594 = vmatprep.subr.mxu0 0.0
          %1595 = vmatpush1.msra.mxu0 0.0
          %1596 = vmatprep.subr.mxu0 0.0
          %1597 = vmatpush1.msra.mxu0 0.0
          %1598 = vmatprep.subr.mxu0 0.0
          %1599 = vmatpush1.msra.mxu0 0.0
          %1600 = vmatprep.subr.mxu0 0.0
          %1601 = vmatpush1.msra.mxu0 0.0
          %1602 = vmatprep.subr.mxu0 0.0
          %1603 = vmatpush1.msra.mxu0 0.0
          %1604 = vmatprep.subr.mxu0 0.0
          %1605 = vmatpush1.msra.mxu0 0.0
          %1606 = vmatprep.subr.mxu0 0.0
          %1607 = vmatpush1.msra.mxu0 0.0
          %1608 = vmatprep.subr.mxu0 0.0
          %1609 = vmatpush1.msra.mxu0 0.0
          %1610 = vmatprep.subr.mxu0 0.0
          %1611 = vmatpush1.msra.mxu0 0.0
          %1612 = vmatprep.subr.mxu0 0.0
          %1613 = vmatpush1.msra.mxu0 0.0
          %1614 = vmatprep.subr.mxu0 0.0
          %1615 = vmatpush1.msra.mxu0 0.0
          %1616 = vmatprep.subr.mxu0 0.0
          %1617 = vmatpush1.msra.mxu0 0.0
          %1618 = vmatprep.subr.mxu0 0.0
          %1619 = vmatpush1.msra.mxu0 0.0
          %1620 = vmatprep.subr.mxu0 0.0
          %1621 = vmatpush1.msra.mxu0 0.0
          %1622 = vmatprep.subr.mxu0 0.0
          %1623 = vmatpush1.msra.mxu0 0.0
          %1624 = vmatprep.subr.mxu0 0.0
          %1625 = vmatpush1.msra.mxu0 0.0
          %1626 = vmatprep.mubr.f32.mxu0 0.0
          %v1627 = vand.u32 %v1185, 4294901760
          %1628 = vmatmul.mubr.f32.gmra.mrb[0].mxu0 %v1627
          %v1629 = vpop.f32.mrb[0].mxu0
          %v1630 = vadd.f32 %v1558, %v1629
          %v1631 = vpop.f32.mrb[0].mxu0
          %1632 = vdwg.mxu0
          %1633 = vst.msk [vmem:[%s1179 + $0x1] sm:$0xff] %vm722, %v1630
        $region44: #{to_rgb_forward.1} parent=35 // pred_fallthru
          _
        %s1634 = smul.u32 %s21, 8
        %v1635 = vld [vmem:[%s249] sm:$0xff]
        %v1636 = vld [vmem:[%s249 + $0x8] sm:$0xff]
        %v1637 = vld [vmem:[%s249 + $0x10] sm:$0xff]
        %v1638 = vld [vmem:[%s249 + $0x18] sm:$0xff]
        %s1639 = smul.u32 %s20, 15
        %s1640 = sld [smem:[#allocation3 + %s1639]]
        %v1641 = vstv %s1640
        %v1642 = vmul.f32 %v1635, %v1641
        %s1643 = smul.u32 %s20, 3
        %s1644 = sadd.s32 %s1643, 1
        %s1645 = smul.u32 %s1644, 5
        %s1646 = sld [smem:[#allocation3 + %s1645]]
        %v1647 = vstv %s1646
        %v1648 = vmul.f32 %v1635, %v1647
        %s1649 = sadd.s32 %s1643, 2
        %s1650 = smul.u32 %s1649, 5
        %s1651 = sld [smem:[#allocation3 + %s1650]]
        %v1652 = vstv %s1651
        %v1653 = vmul.f32 %v1635, %v1652
        %s1654 = sadd.s32 %s1639, 1
        %s1655 = sld [smem:[#allocation3 + %s1654]]
        %v1656 = vstv %s1655
        %v1657 = vmul.f32 %v1636, %v1656
        %v1658 = vadd.f32 %v1642, %v1657
        %s1659 = sadd.s32 %s1645, 1
        %s1660 = sld [smem:[#allocation3 + %s1659]]
        %v1661 = vstv %s1660
        %v1662 = vmul.f32 %v1636, %v1661
        %v1663 = vadd.f32 %v1648, %v1662
        %s1664 = sadd.s32 %s1650, 1
        %s1665 = sld [smem:[#allocation3 + %s1664]]
        %v1666 = vstv %s1665
        %v1667 = vmul.f32 %v1636, %v1666
        %v1668 = vadd.f32 %v1653, %v1667
        %s1669 = sadd.s32 %s1639, 2
        %s1670 = sld [smem:[#allocation3 + %s1669]]
        %v1671 = vstv %s1670
        %v1672 = vmul.f32 %v1637, %v1671
        %v1673 = vadd.f32 %v1658, %v1672
        %s1674 = sadd.s32 %s1645, 2
        %s1675 = sld [smem:[#allocation3 + %s1674]]
        %v1676 = vstv %s1675
        %v1677 = vmul.f32 %v1637, %v1676
        %v1678 = vadd.f32 %v1663, %v1677
        %s1679 = sadd.s32 %s1650, 2
        %s1680 = sld [smem:[#allocation3 + %s1679]]
        %v1681 = vstv %s1680
        %v1682 = vmul.f32 %v1637, %v1681
        %v1683 = vadd.f32 %v1668, %v1682
        %s1684 = sadd.s32 %s1639, 3
        %s1685 = sld [smem:[#allocation3 + %s1684]]
        %v1686 = vstv %s1685
        %v1687 = vmul.f32 %v1638, %v1686
        %v1688 = vadd.f32 %v1673, %v1687
        %s1689 = sadd.s32 %s1645, 3
        %s1690 = sld [smem:[#allocation3 + %s1689]]
        %v1691 = vstv %s1690
        %v1692 = vmul.f32 %v1638, %v1691
        %v1693 = vadd.f32 %v1678, %v1692
        %s1694 = sadd.s32 %s1650, 3
        %s1695 = sld [smem:[#allocation3 + %s1694]]
        %v1696 = vstv %s1695
        %v1697 = vmul.f32 %v1638, %v1696
        %v1698 = vadd.f32 %v1683, %v1697
        %s1699 = sadd.s32 %s1639, 4
        %s1700 = sld [smem:[#allocation3 + %s1699]]
        %v1701 = vstv %s1700
        %v1702 = vadd.f32 %v1688, %v1701
        %s1703 = scalar_lea.vmem [#allocation2], %s1634
        %v1704 = vld [vmem:[%s1703] sm:$0xff]
        %v1705 = vld [vmem:[%s1703 + $0x8] sm:$0x3]
        %v1706 = vmul.f32 %v1704, 0.25
        %v1707 = vmul.f32 %v1704, 0.75
        %v1708 = vmul.f32 %v1705, 0.75
        %vm1711 = vcmask 1046528
        %v1712 = vrot.slane %v1707, 1
        %v1713 = vrot.slane %v1708, 1
        %v1714 = vsel %vm1711, %v1712, %v1713
        %v1716 = vadd.f32 %v1706, %v1714
        %v1717 = vmul.f32 %v1705, 0.25
        %v1720 = vrot.slane %v1706, 1
        %v1721 = vrot.slane %v1717, 1
        %v1722 = vsel %vm1711, %v1720, %v1721
        %v1725 = vadd.f32 %v1707, %v1722
        %v1726 = vadd.f32 %v1708, %v1721
        %v1727 = vadd.f32 %v1702, %v1716
        %vm1728 = vcmask 130048
        %1729 = vst.msk [vmem:[%s262] sm:$0xff] %vm1728, %v1727
        %v1732 = vrot.slane %v1725, 1
        %v1733 = vrot.slane %v1726, 1
        %v1734 = vsel %vm1711, %v1732, %v1733
        %1735 = vrot.lane.b32.xlu0 %v1734, 16
        %v1736 = vpop.permute.xlu0 %1735
        %v1738 = vadd.f32 %v1702, %v1736
        %vm1739 = vcmask 261248
        %1740 = vst.msk [vmem:[%s262] sm:$0xff] %vm1739, %v1738
        %s1741 = sadd.s32 %s1645, 4
        %s1742 = sld [smem:[#allocation3 + %s1741]]
        %v1743 = vstv %s1742
        %v1744 = vadd.f32 %v1693, %v1743
        %s1745 = sadd.s32 %s1634, 16
        %s1746 = scalar_lea.vmem [#allocation2], %s1745
        %v1747 = vld [vmem:[%s1746] sm:$0xff]
        %v1748 = vld [vmem:[%s1746 + $0x8] sm:$0x3]
        %v1749 = vmul.f32 %v1747, 0.25
        %v1750 = vmul.f32 %v1747, 0.75
        %v1751 = vmul.f32 %v1748, 0.75
        %v1754 = vrot.slane %v1750, 1
        %v1755 = vrot.slane %v1751, 1
        %v1756 = vsel %vm1711, %v1754, %v1755
        %v1758 = vadd.f32 %v1749, %v1756
        %v1759 = vmul.f32 %v1748, 0.25
        %v1762 = vrot.slane %v1749, 1
        %v1763 = vrot.slane %v1759, 1
        %v1764 = vsel %vm1711, %v1762, %v1763
        %v1767 = vadd.f32 %v1750, %v1764
        %v1768 = vadd.f32 %v1751, %v1763
        %v1769 = vadd.f32 %v1744, %v1758
        %s1770 = scalar_lea.vmem %s262, 8
        %1771 = vst.msk [vmem:[%s1770] sm:$0xff] %vm1728, %v1769
        %v1774 = vrot.slane %v1767, 1
        %v1775 = vrot.slane %v1768, 1
        %v1776 = vsel %vm1711, %v1774, %v1775
        %1777 = vrot.lane.b32.xlu0 %v1776, 16
        %v1778 = vpop.permute.xlu0 %1777
        %v1780 = vadd.f32 %v1744, %v1778
        %1781 = vst.msk [vmem:[%s1770] sm:$0xff] %vm1739, %v1780
        %s1782 = sadd.s32 %s1650, 4
        %s1783 = sld [smem:[#allocation3 + %s1782]]
        %v1784 = vstv %s1783
        %v1785 = vadd.f32 %v1698, %v1784
        %s1786 = sadd.s32 %s1634, 32
        %s1787 = scalar_lea.vmem [#allocation2], %s1786
        %v1788 = vld [vmem:[%s1787] sm:$0xff]
        %v1789 = vld [vmem:[%s1787 + $0x8] sm:$0x3]
        %v1790 = vmul.f32 %v1788, 0.25
        %v1791 = vmul.f32 %v1788, 0.75
        %v1792 = vmul.f32 %v1789, 0.75
        %v1795 = vrot.slane %v1791, 1
        %v1796 = vrot.slane %v1792, 1
        %v1797 = vsel %vm1711, %v1795, %v1796
        %v1799 = vadd.f32 %v1790, %v1797
        %v1800 = vmul.f32 %v1789, 0.25
        %v1803 = vrot.slane %v1790, 1
        %v1804 = vrot.slane %v1800, 1
        %v1805 = vsel %vm1711, %v1803, %v1804
        %v1808 = vadd.f32 %v1791, %v1805
        %v1809 = vadd.f32 %v1792, %v1804
        %v1810 = vadd.f32 %v1785, %v1799
        %s1811 = scalar_lea.vmem %s262, 16
        %1812 = vst.msk [vmem:[%s1811] sm:$0xff] %vm1728, %v1810
        %v1815 = vrot.slane %v1808, 1
        %v1816 = vrot.slane %v1809, 1
        %v1817 = vsel %vm1711, %v1815, %v1816
        %1818 = vrot.lane.b32.xlu0 %v1817, 16
        %v1819 = vpop.permute.xlu0 %1818
        %v1821 = vadd.f32 %v1785, %v1819
        %1822 = vst.msk [vmem:[%s1811] sm:$0xff] %vm1739, %v1821
        %p1823 = scmp.lt.s32.totalorder %s20, 1
        %s1824 = scalar_select %p1823, %s20, 1
        %p1825 = scmp.lt.s32.totalorder %s21, 0
        %s1826 = scalar_select %p1825, %s21, 0
        %s1827 = smul.addr %s1824, 3
        %s1828 = sadd.s32 %s1826, %s1827
        %s1829 = smul.addr %s1828, 8
        %s1830 = scalar_lea.vmem %s4, %s1829
        // Predicated region
        $region45: #{to_rgb_forward.1} parent=35 // pred_check
          %p1831 = pneg %p144
        $region46: #{to_rgb_forward.1} parent=35 // pred_check_branch
          %1833 = sbr.rel (%p1831) target = $region48
        $region47: #{to_rgb_forward.1} parent=35 // pred_region
          _
        $region48: #{to_rgb_forward.1} parent=35 // pred_fallthru
          _
      $region36: #{to_rgb_forward.1} parent=5 // pred_fallthru
        _
      %p1834 = scmp.le.s32.totalorder 2, %s11
      // Predicated region
      $region49: #{to_rgb_forward.1} parent=5 // pred_check
        %p1835 = pneg %p1834
      $region50: #{to_rgb_forward.1} parent=5 // pred_check_branch
        %1837 = sbr.rel (%p1835) target = $region52
      $region51: #{to_rgb_forward.1} parent=5 // pred_region
        %s1838 = ssub.s32 %s11, 2
        // Predicated region
        $region53: #{to_rgb_forward.1} parent=51 // pred_check
          %p1839 = pneg %p150
        $region54: #{to_rgb_forward.1} parent=51 // pred_check_branch
          %1841 = sbr.rel (%p1839) target = $region56
        $region55: #{to_rgb_forward.1} parent=51 // pred_region
          %p1842 = scmp.lt.s32.totalorder %s22, 1
          %s1843 = scalar_select %p1842, %s22, 1
          %p1844 = scmp.lt.s32.totalorder %s23, 0
          %s1845 = scalar_select %p1844, %s23, 0
          %s1846 = smul.addr %s1843, 3
          %s1847 = sadd.s32 %s1845, %s1846
          %s1848 = smul.addr %s1847, 8
          %s1849 = scalar_lea.vmem %s4, %s1848
        $region56: #{to_rgb_forward.1} parent=51 // pred_fallthru
          _
      $region52: #{to_rgb_forward.1} parent=5 // pred_fallthru
        _
    $region6: #{to_rgb_forward.1} parent=1 // loop_footer
      %s15 = sadd.s32 1, %s11
    $region7: #{to_rgb_forward.1} parent=1 // loop_footer_branch
      %10 = sbr.rel target = $region3
    $region8: #{to_rgb_forward.1} parent=1 // loop_exit
      _
    %1850 = vsyncpa [#allocation4], 1
    %s1851 = scalar_lea.sflag [#allocation4], 1
    %1852 = vsyncpa %s1851, 1

</llo_original>
